<compile_context>
chip_gen: v6e
topology: v6e:2x2x1
jax: 0.10.0
libtpu: 0.0.40
codegen_flags: <defaults>
</compile_context>

<pallas_src>
import functools

import jax
import jax.numpy as jnp
from jax.experimental import pallas as pl
from jax.experimental.pallas import tpu as pltpu


def _clinear_kernel(xr_ref, xi_ref, wr_ref, wi_ref, or_ref, oi_ref,
                    acc_r_ref, acc_i_ref, *, mxu_dtype=None):
    """One (tm, tn) output tile; grid axis 2 iterates over K and accumulates."""
    k = pl.program_id(2)

    @pl.when(k == 0)
    def _init():
        acc_r_ref[...] = jnp.zeros_like(acc_r_ref)
        acc_i_ref[...] = jnp.zeros_like(acc_i_ref)

    xr = xr_ref[...]
    xi = xi_ref[...]
    wr = wr_ref[...]
    wi = wi_ref[...]

    # Gauss sums on the VPU in the input dtype (f32): v5e has no bf16 VPU.
    xs = xr + xi
    ws = wr + wi

    if mxu_dtype is not None:
        xr, xi, xs = (a.astype(mxu_dtype) for a in (xr, xi, xs))
        wr, wi, ws = (a.astype(mxu_dtype) for a in (wr, wi, ws))

    t1 = jnp.dot(xr, wr, preferred_element_type=jnp.float32)
    t2 = jnp.dot(xi, wi, preferred_element_type=jnp.float32)
    t3 = jnp.dot(xs, ws, preferred_element_type=jnp.float32)

    # Fold the Gauss recombination into the two accumulators (no third buffer).
    acc_r_ref[...] += t1 - t2
    acc_i_ref[...] += t3 - t2 - t1

    @pl.when(k == pl.num_programs(2) - 1)
    def _finalize():
        or_ref[...] = acc_r_ref[...].astype(or_ref.dtype)
        oi_ref[...] = acc_i_ref[...].astype(oi_ref.dtype)
        # TODO(synk): bias=True path (module default is bias=False). Note the
        # reference module's Gauss recombination gives real += (b_r - b_i) and
        # imag += 0; it would be added here at finalize time, not per K step.


def _round_up(x: int, m: int) -> int:
    return ((x + m - 1) // m) * m


def _pad2d(a, rows, cols):
    pr, pc = rows - a.shape[0], cols - a.shape[1]
    if pr or pc:
        a = jnp.pad(a, ((0, pr), (0, pc)))
    return a


@functools.partial(jax.jit, static_argnames=("tm", "tn", "tk", "mxu_dtype"))
def complex_linear(x_real, x_imag, wr_t, wi_t, *,
                   tm=128, tn=256, tk=256, mxu_dtype=None):
    """Complex linear: (M, K) real/imag inputs, (K, N) pre-transposed weights.

    Returns (out_real, out_imag), each (M, N), same dtype as the input.
    """
    M, K = x_real.shape
    K2, N = wr_t.shape
    assert K == K2 and x_imag.shape == (M, K) and wi_t.shape == (K, N)

    # Pad every axis up to a tile multiple: zero K-padding adds zero to the
    # dot products; padded M/N rows/cols are sliced away at the end. This also
    # keeps the output tile lane-dense (tn >= 128) even for small out_features.
    Mp, Np, Kp = _round_up(M, tm), _round_up(N, tn), _round_up(K, tk)

    xr = _pad2d(x_real, Mp, Kp)
    xi = _pad2d(x_imag, Mp, Kp)
    wr = _pad2d(wr_t, Kp, Np)
    wi = _pad2d(wi_t, Kp, Np)

    grid = (Mp // tm, Np // tn, Kp // tk)

    kernel = functools.partial(_clinear_kernel, mxu_dtype=mxu_dtype)

    o_real, o_imag = pl.pallas_call(
        kernel,
        out_shape=(
            jax.ShapeDtypeStruct((Mp, Np), x_real.dtype),
            jax.ShapeDtypeStruct((Mp, Np), x_real.dtype),
        ),
        grid=grid,
        in_specs=[
            pl.BlockSpec((tm, tk), lambda i, j, k: (i, k)),   # x_real tile
            pl.BlockSpec((tm, tk), lambda i, j, k: (i, k)),   # x_imag tile
            pl.BlockSpec((tk, tn), lambda i, j, k: (k, j)),   # Wr^T tile
            pl.BlockSpec((tk, tn), lambda i, j, k: (k, j)),   # Wi^T tile
        ],
        out_specs=(
            pl.BlockSpec((tm, tn), lambda i, j, k: (i, j)),   # real out tile
            pl.BlockSpec((tm, tn), lambda i, j, k: (i, j)),   # imag out tile
        ),
        scratch_shapes=[
            pltpu.VMEM((tm, tn), jnp.float32),                # acc_r
            pltpu.VMEM((tm, tn), jnp.float32),                # acc_i
        ],
        compiler_params=pltpu.CompilerParams(
            dimension_semantics=("parallel", "parallel", "arbitrary"),
            vmem_limit_bytes=32 * 1024 * 1024,
        ),
    )(xr, xi, wr, wi)

    return o_real[:M, :N], o_imag[:M, :N]


def init_complex_linear_params(key, in_features, out_features, dtype=jnp.float32):
    """Deterministic synthetic init of the complex weight (real & imag parts)."""
    kr, ki = jax.random.split(key)
    bound = 1.0 / (in_features ** 0.5)
    # PyTorch nn.Linear weight shape is (out_features, in_features); transpose
    # in the caller so the kernel sees lane-dense (K, N) weights.
    wr = jax.random.uniform(kr, (out_features, in_features), dtype, -bound, bound)
    wi = jax.random.uniform(ki, (out_features, in_features), dtype, -bound, bound)
    return wr, wi


if __name__ == "__main__":
    key = jax.random.PRNGKey(0)
    k_x, k_w = jax.random.split(key)

    # Small but non-trivial shapes: non-multiples of the tiles exercise the
    # padding / slicing path, and the grid is (2, 2, 2) so the K-accumulation,
    # pl.when init/finalize and parallel M/N axes are all actually exercised.
    batch, in_features, out_features = 200, 384, 320

    kxr, kxi = jax.random.split(k_x)
    x_real = jax.random.normal(kxr, (batch, in_features), jnp.float32)
    x_imag = jax.random.normal(kxi, (batch, in_features), jnp.float32)

    wr, wi = init_complex_linear_params(k_w, in_features, out_features)
    wr_t, wi_t = wr.T, wi.T   # (K, N)

    # f32 MXU path (default).
    o_real, o_imag = complex_linear(x_real, x_imag, wr_t, wi_t)
    jax.block_until_ready((o_real, o_imag))

    # Plain-JAX high-precision reference of the same complex linear.
    hp = jax.lax.Precision.HIGHEST
    ref_r = jnp.dot(x_real, wr.T, precision=hp) - jnp.dot(x_imag, wi.T, precision=hp)
    ref_i = jnp.dot(x_real, wi.T, precision=hp) + jnp.dot(x_imag, wr.T, precision=hp)

    assert jnp.allclose(o_real, ref_r, atol=2e-3, rtol=2e-3), \
        float(jnp.max(jnp.abs(o_real - ref_r)))
    assert jnp.allclose(o_imag, ref_i, atol=2e-3, rtol=2e-3), \
        float(jnp.max(jnp.abs(o_imag - ref_i)))

    # bf16-MXU variant (f32 accumulation): faster MXU path, looser tolerance.
    b_real, b_imag = complex_linear(x_real, x_imag, wr_t, wi_t,
                                    mxu_dtype=jnp.bfloat16)
    jax.block_until_ready((b_real, b_imag))
    assert jnp.allclose(b_real, ref_r, atol=5e-2, rtol=5e-2)
    assert jnp.allclose(b_imag, ref_i, atol=5e-2, rtol=5e-2)

    print("KERNEL_OK")
</pallas_src>

<mosaic_0001>
module attributes {stable_mosaic.version = 11 : i64} {
  func.func @_clinear_kernel(%arg0: i32, %arg1: i32, %arg2: i32, %arg3: memref<128x256xf32, #tpu.memory_space<vmem>>, %arg4: memref<128x256xf32, #tpu.memory_space<vmem>>, %arg5: memref<256x256xf32, #tpu.memory_space<vmem>>, %arg6: memref<256x256xf32, #tpu.memory_space<vmem>>, %arg7: memref<128x256xf32, #tpu.memory_space<vmem>>, %arg8: memref<128x256xf32, #tpu.memory_space<vmem>>, %arg9: memref<128x256xf32, #tpu.memory_space<vmem>>, %arg10: memref<128x256xf32, #tpu.memory_space<vmem>>) attributes {dimension_semantics = [#tpu.dimension_semantics<parallel>, #tpu.dimension_semantics<parallel>, #tpu.dimension_semantics<arbitrary>], iteration_bounds = array<i64: 2, 2, 2>, scalar_prefetch = 0 : i64, scratch_operands = 2 : i64, tpu.core_type = #tpu.core_type<tc>, window_params = [{transform_indices = @transform_0, window_bounds = array<i64: 128, 256>}, {transform_indices = @transform_1, window_bounds = array<i64: 128, 256>}, {transform_indices = @transform_2, window_bounds = array<i64: 256, 256>}, {transform_indices = @transform_3, window_bounds = array<i64: 256, 256>}, {transform_indices = @transform_4, window_bounds = array<i64: 128, 256>}, {transform_indices = @transform_5, window_bounds = array<i64: 128, 256>}]} {
    %c0_i32 = arith.constant 0 : i32
    %0 = arith.cmpi eq, %arg2, %c0_i32 : i32
    %1 = arith.extui %0 : i1 to i32
    %c0_i32_0 = arith.constant 0 : i32
    %2 = arith.cmpi ne, %1, %c0_i32_0 : i32
    scf.if %2 {
      %cst_19 = arith.constant 0.000000e+00 : f32
      %24 = vector.broadcast %cst_19 : f32 to vector<128x256xf32>
      %c0_20 = arith.constant 0 : index
      %c0_21 = arith.constant 0 : index
      %25 = vector.load %arg9[%c0_20, %c0_21] : memref<128x256xf32, #tpu.memory_space<vmem>>, vector<128x256xf32>
      tpu.vector_store %arg9[%c0_20, %c0_21], %24 {strides = array<i32>} : memref<128x256xf32, #tpu.memory_space<vmem>>, vector<128x256xf32>,
      %cst_22 = arith.constant 0.000000e+00 : f32
      %26 = vector.broadcast %cst_22 : f32 to vector<128x256xf32>
      %c0_23 = arith.constant 0 : index
      %c0_24 = arith.constant 0 : index
      %27 = vector.load %arg10[%c0_23, %c0_24] : memref<128x256xf32, #tpu.memory_space<vmem>>, vector<128x256xf32>
      tpu.vector_store %arg10[%c0_23, %c0_24], %26 {strides = array<i32>} : memref<128x256xf32, #tpu.memory_space<vmem>>, vector<128x256xf32>,
    } else {
    }
    %c0 = arith.constant 0 : index
    %c0_1 = arith.constant 0 : index
    %3 = vector.load %arg3[%c0, %c0_1] : memref<128x256xf32, #tpu.memory_space<vmem>>, vector<128x256xf32>
    %c0_2 = arith.constant 0 : index
    %c0_3 = arith.constant 0 : index
    %4 = vector.load %arg4[%c0_2, %c0_3] : memref<128x256xf32, #tpu.memory_space<vmem>>, vector<128x256xf32>
    %c0_4 = arith.constant 0 : index
    %c0_5 = arith.constant 0 : index
    %5 = vector.load %arg5[%c0_4, %c0_5] : memref<256x256xf32, #tpu.memory_space<vmem>>, vector<256x256xf32>
    %c0_6 = arith.constant 0 : index
    %c0_7 = arith.constant 0 : index
    %6 = vector.load %arg6[%c0_6, %c0_7] : memref<256x256xf32, #tpu.memory_space<vmem>>, vector<256x256xf32>
    %7 = arith.addf %3, %4 : vector<128x256xf32>
    %8 = arith.addf %5, %6 : vector<256x256xf32>
    %cst = arith.constant dense<0.000000e+00> : vector<128x256xf32>
    %9 = tpu.matmul %3, %5, %cst {dimension_numbers = #tpu.dot_dimension_numbers<[1], [0], [0], [1], [0, 0, 1, 1], [], []>} : vector<128x256xf32>, vector<256x256xf32>, vector<128x256xf32> -> vector<128x256xf32>
    %cst_8 = arith.constant dense<0.000000e+00> : vector<128x256xf32>
    %10 = tpu.matmul %4, %6, %cst_8 {dimension_numbers = #tpu.dot_dimension_numbers<[1], [0], [0], [1], [0, 0, 1, 1], [], []>} : vector<128x256xf32>, vector<256x256xf32>, vector<128x256xf32> -> vector<128x256xf32>
    %cst_9 = arith.constant dense<0.000000e+00> : vector<128x256xf32>
    %11 = tpu.matmul %7, %8, %cst_9 {dimension_numbers = #tpu.dot_dimension_numbers<[1], [0], [0], [1], [0, 0, 1, 1], [], []>} : vector<128x256xf32>, vector<256x256xf32>, vector<128x256xf32> -> vector<128x256xf32>
    %c0_10 = arith.constant 0 : index
    %c0_11 = arith.constant 0 : index
    %12 = vector.load %arg9[%c0_10, %c0_11] : memref<128x256xf32, #tpu.memory_space<vmem>>, vector<128x256xf32>
    %13 = arith.subf %9, %10 : vector<128x256xf32>
    %14 = arith.addf %12, %13 : vector<128x256xf32>
    %c0_12 = arith.constant 0 : index
    %c0_13 = arith.constant 0 : index
    %15 = vector.load %arg9[%c0_12, %c0_13] : memref<128x256xf32, #tpu.memory_space<vmem>>, vector<128x256xf32>
    tpu.vector_store %arg9[%c0_12, %c0_13], %14 {strides = array<i32>} : memref<128x256xf32, #tpu.memory_space<vmem>>, vector<128x256xf32>,
    %c0_14 = arith.constant 0 : index
    %c0_15 = arith.constant 0 : index
    %16 = vector.load %arg10[%c0_14, %c0_15] : memref<128x256xf32, #tpu.memory_space<vmem>>, vector<128x256xf32>
    %17 = arith.subf %11, %10 : vector<128x256xf32>
    %18 = arith.subf %17, %9 : vector<128x256xf32>
    %19 = arith.addf %16, %18 : vector<128x256xf32>
    %c0_16 = arith.constant 0 : index
    %c0_17 = arith.constant 0 : index
    %20 = vector.load %arg10[%c0_16, %c0_17] : memref<128x256xf32, #tpu.memory_space<vmem>>, vector<128x256xf32>
    tpu.vector_store %arg10[%c0_16, %c0_17], %19 {strides = array<i32>} : memref<128x256xf32, #tpu.memory_space<vmem>>, vector<128x256xf32>,
    %c1_i32 = arith.constant 1 : i32
    %21 = arith.cmpi eq, %arg2, %c1_i32 : i32
    %22 = arith.extui %21 : i1 to i32
    %c0_i32_18 = arith.constant 0 : i32
    %23 = arith.cmpi ne, %22, %c0_i32_18 : i32
    scf.if %23 {
      %c0_19 = arith.constant 0 : index
      %c0_20 = arith.constant 0 : index
      %24 = vector.load %arg9[%c0_19, %c0_20] : memref<128x256xf32, #tpu.memory_space<vmem>>, vector<128x256xf32>
      %c0_21 = arith.constant 0 : index
      %c0_22 = arith.constant 0 : index
      %25 = vector.load %arg7[%c0_21, %c0_22] : memref<128x256xf32, #tpu.memory_space<vmem>>, vector<128x256xf32>
      tpu.vector_store %arg7[%c0_21, %c0_22], %24 {strides = array<i32>} : memref<128x256xf32, #tpu.memory_space<vmem>>, vector<128x256xf32>,
      %c0_23 = arith.constant 0 : index
      %c0_24 = arith.constant 0 : index
      %26 = vector.load %arg10[%c0_23, %c0_24] : memref<128x256xf32, #tpu.memory_space<vmem>>, vector<128x256xf32>
      %c0_25 = arith.constant 0 : index
      %c0_26 = arith.constant 0 : index
      %27 = vector.load %arg8[%c0_25, %c0_26] : memref<128x256xf32, #tpu.memory_space<vmem>>, vector<128x256xf32>
      tpu.vector_store %arg8[%c0_25, %c0_26], %26 {strides = array<i32>} : memref<128x256xf32, #tpu.memory_space<vmem>>, vector<128x256xf32>,
    } else {
    }
    return
  }
  func.func @transform_0(%arg0: i32, %arg1: i32, %arg2: i32) -> (i32, i32) {
    %c0_i32 = arith.constant 0 : i32
    return %arg0, %arg2 : i32, i32
  }
  func.func @transform_1(%arg0: i32, %arg1: i32, %arg2: i32) -> (i32, i32) {
    %c0_i32 = arith.constant 0 : i32
    return %arg0, %arg2 : i32, i32
  }
  func.func @transform_2(%arg0: i32, %arg1: i32, %arg2: i32) -> (i32, i32) {
    %c0_i32 = arith.constant 0 : i32
    return %arg2, %arg1 : i32, i32
  }
  func.func @transform_3(%arg0: i32, %arg1: i32, %arg2: i32) -> (i32, i32) {
    %c0_i32 = arith.constant 0 : i32
    return %arg2, %arg1 : i32, i32
  }
  func.func @transform_4(%arg0: i32, %arg1: i32, %arg2: i32) -> (i32, i32) {
    %c0_i32 = arith.constant 0 : i32
    return %arg0, %arg1 : i32, i32
  }
  func.func @transform_5(%arg0: i32, %arg1: i32, %arg2: i32) -> (i32, i32) {
    %c0_i32 = arith.constant 0 : i32
    return %arg0, %arg1 : i32, i32
  }
}

</mosaic_0001>

<llo_original>
// kernel: complex_linear.1
$region0: #{complex_linear.1}
  #allocation0 [shape = 'u32[]', space=smem, size = 0x4, offset = 0x4, fixed_abs, tag = 'smem constant byte address 0x4 - core index']
  #allocation1 [shape = 'u32[144,128]{1,0:T(1,128)}', space=vmem, size = 0x12000, scoped, tag = 'internal scratch']
  #allocation2 [shape = 'f32[128,256]{1,0:T(8,128)}', space=vmem, size = 0x20000, scoped, tag = 'scratch operand']
  #allocation3 [shape = 'f32[128,256]{1,0:T(8,128)}', space=vmem, size = 0x20000, scoped, tag = 'scratch operand']
  %s0 = inlined_call_operand.vmem [shape: f32[256,512], index: 0, kind: input, shape index: {}]
  %s1 = inlined_call_operand.vmem [shape: f32[256,512], index: 1, kind: input, shape index: {}]
  %s2 = inlined_call_operand.vmem [shape: f32[512,512], index: 2, kind: input, shape index: {}]
  %s3 = inlined_call_operand.vmem [shape: f32[512,512], index: 3, kind: input, shape index: {}]
  %s4 = inlined_call_operand.vmem [shape: f32[256,512], index: 4, kind: output, shape index: {0}]
  %s5 = inlined_call_operand.vmem [shape: f32[256,512], index: 5, kind: output, shape index: {1}]
  %6 = xla_tuple %s4, %s5
  %s7 = sld [smem:[#allocation0]]
  $region195: #{complex_linear.1} parent=0
    _
  %s9 = ssub.s32 1, %s7
  %s10 = scalar_select 0, %s9, %s7
  $region1: #{complex_linear.1} parent=0
    #allocation4 [shape = 'u8[262144]{0}', space=vmem, size = 0x40000, scoped, tag = 'input window, operand 0']
    #allocation5 [shape = 'u8[262144]{0}', space=vmem, size = 0x40000, scoped, tag = 'input window, operand 1']
    #allocation6 [shape = 'u8[524288]{0}', space=vmem, size = 0x80000, scoped, tag = 'input window, operand 2']
    #allocation7 [shape = 'u8[524288]{0}', space=vmem, size = 0x80000, scoped, tag = 'input window, operand 3']
    #allocation8 [shape = 'u8[262144]{0}', space=vmem, size = 0x40000, scoped, tag = 'output window, operand 0']
    #allocation9 [shape = 'u8[262144]{0}', space=vmem, size = 0x40000, scoped, tag = 'output window, operand 1']
    loop: start=0, step=1, limit=10
    $region2: #{complex_linear.1} parent=1 // loop_pre_header
      _
    $region3: #{complex_linear.1} parent=1 // loop_header
      %s12 = sphi 0, %s16
      %p13 = scmp.ge.s32.totalorder %s12, 10
      %s19 = sphi 0, %s38
      %s20 = sphi 0, %s34
      %s21 = sphi 0, %s30
      %s22 = sphi 0, %s19
      %s23 = sphi 0, %s20
      %s24 = sphi 0, %s21
      %s25 = sphi 0, %s22
      %s26 = sphi 0, %s23
      %s27 = sphi 0, %s24
      %s43 = sphi 0, %s45
      %s46 = sphi 0, %s43
      %s47 = sphi 0, %s46
      %s63 = sphi 0, %s47
      %s71 = sphi 0, %s73
      %s74 = sphi 0, %s71
      %s75 = sphi 0, %s74
      %s91 = sphi 0, %s75
      %s99 = sphi 0, %s101
      %s102 = sphi 0, %s99
      %s103 = sphi 0, %s102
      %s119 = sphi 0, %s103
      %s127 = sphi 0, %s129
      %s130 = sphi 0, %s127
      %s131 = sphi 0, %s130
      %s147 = sphi 0, %s131
      %s155 = sphi 0, %s157
      %s158 = sphi 0, %s155
      %s159 = sphi 0, %s158
      %s175 = sphi 0, %s159
      %s183 = sphi 0, %s185
      %s186 = sphi 0, %s183
      %s187 = sphi 0, %s186
      %s203 = sphi 0, %s187
    $region4: #{complex_linear.1} parent=1 // loop_header_branch
      %15 = sbr.rel (%p13) target = $region8
    $region5: #{complex_linear.1} parent=1 // loop_body
      %s17 = ssub.s32 %s12, 1
      %s18 = ssub.s32 %s12, 2
      %s28 = sadd.s32 1, %s21
      %p29 = scmp.ge.s32.totalorder %s28, 2
      %s30 = scalar_select %p29, 0, %s28
      %s31 = sadd.s32 1, %s20
      %s32 = scalar_select %p29, %s31, %s20
      %p33 = scmp.ge.s32.totalorder %s32, 2
      %s34 = scalar_select %p33, 0, %s32
      %s35 = sadd.s32 1, %s19
      %s36 = scalar_select %p33, %s35, %s19
      %p37 = scmp.ge.s32.totalorder %s36, 2
      %s38 = scalar_select %p37, 0, %s36
      %s39 = ssub.s32 %s19, %s38
      %s40 = ssub.s32 %s21, %s30
      %s41 = sor.u32 %s39, %s40
      %p42 = scmp.eq.s32.totalorder %s41, 0
      %s44 = sadd.s32 %s43, 1
      %s45 = scalar_select %p42, %s43, %s44
      %p48 = pneg %p42
      %p49 = scmp.eq.s32.totalorder %s12, 7
      %p50 = por %p48, %p49
      %p51 = scmp.ne.s32.totalorder %s43, %s46
      %p52 = scmp.eq.s32.totalorder %s12, 0
      %p53 = por %p51, %p52
      %p54 = scmp.ne.s32.totalorder %s43, %s46
      %p55 = scmp.eq.s32.totalorder %s17, 7
      %p56 = por %p54, %p55
      %p57 = scmp.ne.s32.totalorder %s46, %s47
      %p58 = scmp.eq.s32.totalorder %s17, 0
      %p59 = por %p57, %p58
      %p60 = scmp.ne.s32.totalorder %s46, %s47
      %p61 = scmp.eq.s32.totalorder %s18, 7
      %p62 = por %p60, %p61
      %p64 = scmp.ne.s32.totalorder %s47, %s63
      %p65 = scmp.eq.s32.totalorder %s18, 0
      %p66 = por %p64, %p65
      %s67 = ssub.s32 %s19, %s38
      %s68 = ssub.s32 %s21, %s30
      %s69 = sor.u32 %s67, %s68
      %p70 = scmp.eq.s32.totalorder %s69, 0
      %s72 = sadd.s32 %s71, 1
      %s73 = scalar_select %p70, %s71, %s72
      %p76 = pneg %p70
      %p77 = scmp.eq.s32.totalorder %s12, 7
      %p78 = por %p76, %p77
      %p79 = scmp.ne.s32.totalorder %s71, %s74
      %p80 = scmp.eq.s32.totalorder %s12, 0
      %p81 = por %p79, %p80
      %p82 = scmp.ne.s32.totalorder %s71, %s74
      %p83 = scmp.eq.s32.totalorder %s17, 7
      %p84 = por %p82, %p83
      %p85 = scmp.ne.s32.totalorder %s74, %s75
      %p86 = scmp.eq.s32.totalorder %s17, 0
      %p87 = por %p85, %p86
      %p88 = scmp.ne.s32.totalorder %s74, %s75
      %p89 = scmp.eq.s32.totalorder %s18, 7
      %p90 = por %p88, %p89
      %p92 = scmp.ne.s32.totalorder %s75, %s91
      %p93 = scmp.eq.s32.totalorder %s18, 0
      %p94 = por %p92, %p93
      %s95 = ssub.s32 %s21, %s30
      %s96 = ssub.s32 %s20, %s34
      %s97 = sor.u32 %s95, %s96
      %p98 = scmp.eq.s32.totalorder %s97, 0
      %s100 = sadd.s32 %s99, 1
      %s101 = scalar_select %p98, %s99, %s100
      %p104 = pneg %p98
      %p105 = scmp.eq.s32.totalorder %s12, 7
      %p106 = por %p104, %p105
      %p107 = scmp.ne.s32.totalorder %s99, %s102
      %p108 = scmp.eq.s32.totalorder %s12, 0
      %p109 = por %p107, %p108
      %p110 = scmp.ne.s32.totalorder %s99, %s102
      %p111 = scmp.eq.s32.totalorder %s17, 7
      %p112 = por %p110, %p111
      %p113 = scmp.ne.s32.totalorder %s102, %s103
      %p114 = scmp.eq.s32.totalorder %s17, 0
      %p115 = por %p113, %p114
      %p116 = scmp.ne.s32.totalorder %s102, %s103
      %p117 = scmp.eq.s32.totalorder %s18, 7
      %p118 = por %p116, %p117
      %p120 = scmp.ne.s32.totalorder %s103, %s119
      %p121 = scmp.eq.s32.totalorder %s18, 0
      %p122 = por %p120, %p121
      %s123 = ssub.s32 %s21, %s30
      %s124 = ssub.s32 %s20, %s34
      %s125 = sor.u32 %s123, %s124
      %p126 = scmp.eq.s32.totalorder %s125, 0
      %s128 = sadd.s32 %s127, 1
      %s129 = scalar_select %p126, %s127, %s128
      %p132 = pneg %p126
      %p133 = scmp.eq.s32.totalorder %s12, 7
      %p134 = por %p132, %p133
      %p135 = scmp.ne.s32.totalorder %s127, %s130
      %p136 = scmp.eq.s32.totalorder %s12, 0
      %p137 = por %p135, %p136
      %p138 = scmp.ne.s32.totalorder %s127, %s130
      %p139 = scmp.eq.s32.totalorder %s17, 7
      %p140 = por %p138, %p139
      %p141 = scmp.ne.s32.totalorder %s130, %s131
      %p142 = scmp.eq.s32.totalorder %s17, 0
      %p143 = por %p141, %p142
      %p144 = scmp.ne.s32.totalorder %s130, %s131
      %p145 = scmp.eq.s32.totalorder %s18, 7
      %p146 = por %p144, %p145
      %p148 = scmp.ne.s32.totalorder %s131, %s147
      %p149 = scmp.eq.s32.totalorder %s18, 0
      %p150 = por %p148, %p149
      %s151 = ssub.s32 %s19, %s38
      %s152 = ssub.s32 %s20, %s34
      %s153 = sor.u32 %s151, %s152
      %p154 = scmp.eq.s32.totalorder %s153, 0
      %s156 = sadd.s32 %s155, 1
      %s157 = scalar_select %p154, %s155, %s156
      %p160 = pneg %p154
      %p161 = scmp.eq.s32.totalorder %s12, 7
      %p162 = por %p160, %p161
      %p163 = scmp.ne.s32.totalorder %s155, %s158
      %p164 = scmp.eq.s32.totalorder %s12, 0
      %p165 = por %p163, %p164
      %p166 = scmp.ne.s32.totalorder %s155, %s158
      %p167 = scmp.eq.s32.totalorder %s17, 7
      %p168 = por %p166, %p167
      %p169 = scmp.ne.s32.totalorder %s158, %s159
      %p170 = scmp.eq.s32.totalorder %s17, 0
      %p171 = por %p169, %p170
      %p172 = scmp.ne.s32.totalorder %s158, %s159
      %p173 = scmp.eq.s32.totalorder %s18, 7
      %p174 = por %p172, %p173
      %p176 = scmp.ne.s32.totalorder %s159, %s175
      %p177 = scmp.eq.s32.totalorder %s18, 0
      %p178 = por %p176, %p177
      %s179 = ssub.s32 %s19, %s38
      %s180 = ssub.s32 %s20, %s34
      %s181 = sor.u32 %s179, %s180
      %p182 = scmp.eq.s32.totalorder %s181, 0
      %s184 = sadd.s32 %s183, 1
      %s185 = scalar_select %p182, %s183, %s184
      %p188 = pneg %p182
      %p189 = scmp.eq.s32.totalorder %s12, 7
      %p190 = por %p188, %p189
      %p191 = scmp.ne.s32.totalorder %s183, %s186
      %p192 = scmp.eq.s32.totalorder %s12, 0
      %p193 = por %p191, %p192
      %p194 = scmp.ne.s32.totalorder %s183, %s186
      %p195 = scmp.eq.s32.totalorder %s17, 7
      %p196 = por %p194, %p195
      %p197 = scmp.ne.s32.totalorder %s186, %s187
      %p198 = scmp.eq.s32.totalorder %s17, 0
      %p199 = por %p197, %p198
      %p200 = scmp.ne.s32.totalorder %s186, %s187
      %p201 = scmp.eq.s32.totalorder %s18, 7
      %p202 = por %p200, %p201
      %p204 = scmp.ne.s32.totalorder %s187, %s203
      %p205 = scmp.eq.s32.totalorder %s18, 0
      %p206 = por %p204, %p205
      %p207 = scmp.le.s32.totalorder 1, %s12
      %p208 = scmp.lt.s32.totalorder %s12, 9
      %p209 = pnand %p207, %p208
      %p210 = pneg %p209
      // Predicated region
      $region9: #{complex_linear.1} parent=5 // pred_check
        _
      $region10: #{complex_linear.1} parent=5 // pred_check_branch
        %212 = sbr.rel (%p209) target = $region12
      $region11: #{complex_linear.1} parent=5 // pred_region
        %s213 = ssub.s32 %s12, 1
      $region12: #{complex_linear.1} parent=5 // pred_fallthru
        _
      %p214 = scmp.lt.s32.totalorder %s12, 8
      // Predicated region
      $region13: #{complex_linear.1} parent=5 // pred_check
        %p215 = pneg %p214
      $region14: #{complex_linear.1} parent=5 // pred_check_branch
        %217 = sbr.rel (%p215) target = $region16
      $region15: #{complex_linear.1} parent=5 // pred_region
        // Predicated region
        $region17: #{complex_linear.1} parent=15 // pred_check
          %p218 = pneg %p53
        $region18: #{complex_linear.1} parent=15 // pred_check_branch
          %220 = sbr.rel (%p218) target = $region20
        $region19: #{complex_linear.1} parent=15 // pred_region
          %s221 = sand.u32 %s43, 1
          %s222 = sand.u32 %s43, 1
          %s223 = smul.addr %s222, 256
          %s224 = scalar_lea.vmem [#allocation4], %s223
          %s225 = smul.u32 16, %s19
          %s226 = smul.u32 2, %s21
          %s227 = smul.addr %s225, 4
          %s228 = sadd.s32 %s226, %s227
          %s229 = smul.addr %s228, 8
          %s230 = scalar_lea.vmem %s0, %s229
          // Predicated region
          $region21: #{complex_linear.1} parent=19 // pred_check
            _
          $region22: #{complex_linear.1} parent=19 // pred_check_branch
            %232 = sbr.rel (0) target = $region24
          $region23: #{complex_linear.1} parent=19 // pred_region
            // Predicated region
            $region25: #{complex_linear.1} parent=23 // pred_check
              _
            $region26: #{complex_linear.1} parent=23 // pred_check_branch
              %234 = sbr.rel (0) target = $region28
            $region27: #{complex_linear.1} parent=23 // pred_region
              loop: start=0, step=1, limit=1
              $region29: #{complex_linear.1} parent=27 // loop_pre_header
                _
              $region30: #{complex_linear.1} parent=27 // loop_header
                %s236 = sphi 0, %s240
                %p237 = scmp.ge.s32.totalorder %s236, 1
                %s241 = sphi %s230, %s230
                %s242 = sphi %s224, %s224
              $region31: #{complex_linear.1} parent=27 // loop_header_branch
                %239 = sbr.rel (%p237) target = $region35
              $region32: #{complex_linear.1} parent=27 // loop_body
                %v243 = vld [vmem:[%s241] sm:$0xff]
                %244 = vst [vmem:[%s242] sm:$0xff] %v243
                %v245 = vld [vmem:[%s241 + $0x8] sm:$0xff]
                %246 = vst [vmem:[%s242 + $0x8] sm:$0xff] %v245
                %v247 = vld [vmem:[%s241 + $0x20] sm:$0xff]
                %248 = vst [vmem:[%s242 + $0x10] sm:$0xff] %v247
                %v249 = vld [vmem:[%s241 + $0x28] sm:$0xff]
                %250 = vst [vmem:[%s242 + $0x18] sm:$0xff] %v249
                %v251 = vld [vmem:[%s241 + $0x40] sm:$0xff]
                %252 = vst [vmem:[%s242 + $0x20] sm:$0xff] %v251
                %v253 = vld [vmem:[%s241 + $0x48] sm:$0xff]
                %254 = vst [vmem:[%s242 + $0x28] sm:$0xff] %v253
                %v255 = vld [vmem:[%s241 + $0x60] sm:$0xff]
                %256 = vst [vmem:[%s242 + $0x30] sm:$0xff] %v255
                %v257 = vld [vmem:[%s241 + $0x68] sm:$0xff]
                %258 = vst [vmem:[%s242 + $0x38] sm:$0xff] %v257
                %v259 = vld [vmem:[%s241 + $0x80] sm:$0xff]
                %260 = vst [vmem:[%s242 + $0x40] sm:$0xff] %v259
                %v261 = vld [vmem:[%s241 + $0x88] sm:$0xff]
                %262 = vst [vmem:[%s242 + $0x48] sm:$0xff] %v261
                %v263 = vld [vmem:[%s241 + $0xa0] sm:$0xff]
                %264 = vst [vmem:[%s242 + $0x50] sm:$0xff] %v263
                %v265 = vld [vmem:[%s241 + $0xa8] sm:$0xff]
                %266 = vst [vmem:[%s242 + $0x58] sm:$0xff] %v265
                %v267 = vld [vmem:[%s241 + $0xc0] sm:$0xff]
                %268 = vst [vmem:[%s242 + $0x60] sm:$0xff] %v267
                %v269 = vld [vmem:[%s241 + $0xc8] sm:$0xff]
                %270 = vst [vmem:[%s242 + $0x68] sm:$0xff] %v269
                %v271 = vld [vmem:[%s241 + $0xe0] sm:$0xff]
                %272 = vst [vmem:[%s242 + $0x70] sm:$0xff] %v271
                %v273 = vld [vmem:[%s241 + $0xe8] sm:$0xff]
                %274 = vst [vmem:[%s242 + $0x78] sm:$0xff] %v273
                %v275 = vld [vmem:[%s241 + $0x100] sm:$0xff]
                %276 = vst [vmem:[%s242 + $0x80] sm:$0xff] %v275
                %v277 = vld [vmem:[%s241 + $0x108] sm:$0xff]
                %278 = vst [vmem:[%s242 + $0x88] sm:$0xff] %v277
                %v279 = vld [vmem:[%s241 + $0x120] sm:$0xff]
                %280 = vst [vmem:[%s242 + $0x90] sm:$0xff] %v279
                %v281 = vld [vmem:[%s241 + $0x128] sm:$0xff]
                %282 = vst [vmem:[%s242 + $0x98] sm:$0xff] %v281
                %v283 = vld [vmem:[%s241 + $0x140] sm:$0xff]
                %284 = vst [vmem:[%s242 + $0xa0] sm:$0xff] %v283
                %v285 = vld [vmem:[%s241 + $0x148] sm:$0xff]
                %286 = vst [vmem:[%s242 + $0xa8] sm:$0xff] %v285
                %v287 = vld [vmem:[%s241 + $0x160] sm:$0xff]
                %288 = vst [vmem:[%s242 + $0xb0] sm:$0xff] %v287
                %v289 = vld [vmem:[%s241 + $0x168] sm:$0xff]
                %290 = vst [vmem:[%s242 + $0xb8] sm:$0xff] %v289
                %v291 = vld [vmem:[%s241 + $0x180] sm:$0xff]
                %292 = vst [vmem:[%s242 + $0xc0] sm:$0xff] %v291
                %v293 = vld [vmem:[%s241 + $0x188] sm:$0xff]
                %294 = vst [vmem:[%s242 + $0xc8] sm:$0xff] %v293
                %v295 = vld [vmem:[%s241 + $0x1a0] sm:$0xff]
                %296 = vst [vmem:[%s242 + $0xd0] sm:$0xff] %v295
                %v297 = vld [vmem:[%s241 + $0x1a8] sm:$0xff]
                %298 = vst [vmem:[%s242 + $0xd8] sm:$0xff] %v297
                %v299 = vld [vmem:[%s241 + $0x1c0] sm:$0xff]
                %300 = vst [vmem:[%s242 + $0xe0] sm:$0xff] %v299
                %v301 = vld [vmem:[%s241 + $0x1c8] sm:$0xff]
                %302 = vst [vmem:[%s242 + $0xe8] sm:$0xff] %v301
                %v303 = vld [vmem:[%s241 + $0x1e0] sm:$0xff]
                %304 = vst [vmem:[%s242 + $0xf0] sm:$0xff] %v303
                %v305 = vld [vmem:[%s241 + $0x1e8] sm:$0xff]
                %306 = vst [vmem:[%s242 + $0xf8] sm:$0xff] %v305
              $region33: #{complex_linear.1} parent=27 // loop_footer
                %s240 = sadd.s32 1, %s236
              $region34: #{complex_linear.1} parent=27 // loop_footer_branch
                %235 = sbr.rel target = $region30
              $region35: #{complex_linear.1} parent=27 // loop_exit
                _
            $region28: #{complex_linear.1} parent=23 // pred_fallthru
              _
            // Predicated region
            $region36: #{complex_linear.1} parent=23 // pred_check
              _
            $region37: #{complex_linear.1} parent=23 // pred_check_branch
              %308 = sbr.rel target = $region39
            $region38: #{complex_linear.1} parent=23 // pred_region
              _
            $region39: #{complex_linear.1} parent=23 // pred_fallthru
              _
          $region24: #{complex_linear.1} parent=19 // pred_fallthru
            _
          %309 = vnop
        $region20: #{complex_linear.1} parent=15 // pred_fallthru
          _
        // Predicated region
        $region40: #{complex_linear.1} parent=15 // pred_check
          %p310 = pneg %p81
        $region41: #{complex_linear.1} parent=15 // pred_check_branch
          %312 = sbr.rel (%p310) target = $region43
        $region42: #{complex_linear.1} parent=15 // pred_region
          %s313 = sand.u32 %s71, 1
          %s314 = sand.u32 %s71, 1
          %s315 = smul.addr %s314, 256
          %s316 = scalar_lea.vmem [#allocation5], %s315
          %s317 = smul.u32 16, %s19
          %s318 = smul.u32 2, %s21
          %s319 = smul.addr %s317, 4
          %s320 = sadd.s32 %s318, %s319
          %s321 = smul.addr %s320, 8
          %s322 = scalar_lea.vmem %s1, %s321
          // Predicated region
          $region44: #{complex_linear.1} parent=42 // pred_check
            _
          $region45: #{complex_linear.1} parent=42 // pred_check_branch
            %324 = sbr.rel (0) target = $region47
          $region46: #{complex_linear.1} parent=42 // pred_region
            // Predicated region
            $region48: #{complex_linear.1} parent=46 // pred_check
              _
            $region49: #{complex_linear.1} parent=46 // pred_check_branch
              %326 = sbr.rel (0) target = $region51
            $region50: #{complex_linear.1} parent=46 // pred_region
              loop: start=0, step=1, limit=1
              $region52: #{complex_linear.1} parent=50 // loop_pre_header
                _
              $region53: #{complex_linear.1} parent=50 // loop_header
                %s328 = sphi 0, %s332
                %p329 = scmp.ge.s32.totalorder %s328, 1
                %s333 = sphi %s322, %s322
                %s334 = sphi %s316, %s316
              $region54: #{complex_linear.1} parent=50 // loop_header_branch
                %331 = sbr.rel (%p329) target = $region58
              $region55: #{complex_linear.1} parent=50 // loop_body
                %v335 = vld [vmem:[%s333] sm:$0xff]
                %336 = vst [vmem:[%s334] sm:$0xff] %v335
                %v337 = vld [vmem:[%s333 + $0x8] sm:$0xff]
                %338 = vst [vmem:[%s334 + $0x8] sm:$0xff] %v337
                %v339 = vld [vmem:[%s333 + $0x20] sm:$0xff]
                %340 = vst [vmem:[%s334 + $0x10] sm:$0xff] %v339
                %v341 = vld [vmem:[%s333 + $0x28] sm:$0xff]
                %342 = vst [vmem:[%s334 + $0x18] sm:$0xff] %v341
                %v343 = vld [vmem:[%s333 + $0x40] sm:$0xff]
                %344 = vst [vmem:[%s334 + $0x20] sm:$0xff] %v343
                %v345 = vld [vmem:[%s333 + $0x48] sm:$0xff]
                %346 = vst [vmem:[%s334 + $0x28] sm:$0xff] %v345
                %v347 = vld [vmem:[%s333 + $0x60] sm:$0xff]
                %348 = vst [vmem:[%s334 + $0x30] sm:$0xff] %v347
                %v349 = vld [vmem:[%s333 + $0x68] sm:$0xff]
                %350 = vst [vmem:[%s334 + $0x38] sm:$0xff] %v349
                %v351 = vld [vmem:[%s333 + $0x80] sm:$0xff]
                %352 = vst [vmem:[%s334 + $0x40] sm:$0xff] %v351
                %v353 = vld [vmem:[%s333 + $0x88] sm:$0xff]
                %354 = vst [vmem:[%s334 + $0x48] sm:$0xff] %v353
                %v355 = vld [vmem:[%s333 + $0xa0] sm:$0xff]
                %356 = vst [vmem:[%s334 + $0x50] sm:$0xff] %v355
                %v357 = vld [vmem:[%s333 + $0xa8] sm:$0xff]
                %358 = vst [vmem:[%s334 + $0x58] sm:$0xff] %v357
                %v359 = vld [vmem:[%s333 + $0xc0] sm:$0xff]
                %360 = vst [vmem:[%s334 + $0x60] sm:$0xff] %v359
                %v361 = vld [vmem:[%s333 + $0xc8] sm:$0xff]
                %362 = vst [vmem:[%s334 + $0x68] sm:$0xff] %v361
                %v363 = vld [vmem:[%s333 + $0xe0] sm:$0xff]
                %364 = vst [vmem:[%s334 + $0x70] sm:$0xff] %v363
                %v365 = vld [vmem:[%s333 + $0xe8] sm:$0xff]
                %366 = vst [vmem:[%s334 + $0x78] sm:$0xff] %v365
                %v367 = vld [vmem:[%s333 + $0x100] sm:$0xff]
                %368 = vst [vmem:[%s334 + $0x80] sm:$0xff] %v367
                %v369 = vld [vmem:[%s333 + $0x108] sm:$0xff]
                %370 = vst [vmem:[%s334 + $0x88] sm:$0xff] %v369
                %v371 = vld [vmem:[%s333 + $0x120] sm:$0xff]
                %372 = vst [vmem:[%s334 + $0x90] sm:$0xff] %v371
                %v373 = vld [vmem:[%s333 + $0x128] sm:$0xff]
                %374 = vst [vmem:[%s334 + $0x98] sm:$0xff] %v373
                %v375 = vld [vmem:[%s333 + $0x140] sm:$0xff]
                %376 = vst [vmem:[%s334 + $0xa0] sm:$0xff] %v375
                %v377 = vld [vmem:[%s333 + $0x148] sm:$0xff]
                %378 = vst [vmem:[%s334 + $0xa8] sm:$0xff] %v377
                %v379 = vld [vmem:[%s333 + $0x160] sm:$0xff]
                %380 = vst [vmem:[%s334 + $0xb0] sm:$0xff] %v379
                %v381 = vld [vmem:[%s333 + $0x168] sm:$0xff]
                %382 = vst [vmem:[%s334 + $0xb8] sm:$0xff] %v381
                %v383 = vld [vmem:[%s333 + $0x180] sm:$0xff]
                %384 = vst [vmem:[%s334 + $0xc0] sm:$0xff] %v383
                %v385 = vld [vmem:[%s333 + $0x188] sm:$0xff]
                %386 = vst [vmem:[%s334 + $0xc8] sm:$0xff] %v385
                %v387 = vld [vmem:[%s333 + $0x1a0] sm:$0xff]
                %388 = vst [vmem:[%s334 + $0xd0] sm:$0xff] %v387
                %v389 = vld [vmem:[%s333 + $0x1a8] sm:$0xff]
                %390 = vst [vmem:[%s334 + $0xd8] sm:$0xff] %v389
                %v391 = vld [vmem:[%s333 + $0x1c0] sm:$0xff]
                %392 = vst [vmem:[%s334 + $0xe0] sm:$0xff] %v391
                %v393 = vld [vmem:[%s333 + $0x1c8] sm:$0xff]
                %394 = vst [vmem:[%s334 + $0xe8] sm:$0xff] %v393
                %v395 = vld [vmem:[%s333 + $0x1e0] sm:$0xff]
                %396 = vst [vmem:[%s334 + $0xf0] sm:$0xff] %v395
                %v397 = vld [vmem:[%s333 + $0x1e8] sm:$0xff]
                %398 = vst [vmem:[%s334 + $0xf8] sm:$0xff] %v397
              $region56: #{complex_linear.1} parent=50 // loop_footer
                %s332 = sadd.s32 1, %s328
              $region57: #{complex_linear.1} parent=50 // loop_footer_branch
                %327 = sbr.rel target = $region53
              $region58: #{complex_linear.1} parent=50 // loop_exit
                _
            $region51: #{complex_linear.1} parent=46 // pred_fallthru
              _
            // Predicated region
            $region59: #{complex_linear.1} parent=46 // pred_check
              _
            $region60: #{complex_linear.1} parent=46 // pred_check_branch
              %400 = sbr.rel target = $region62
            $region61: #{complex_linear.1} parent=46 // pred_region
              _
            $region62: #{complex_linear.1} parent=46 // pred_fallthru
              _
          $region47: #{complex_linear.1} parent=42 // pred_fallthru
            _
          %401 = vnop
        $region43: #{complex_linear.1} parent=15 // pred_fallthru
          _
        // Predicated region
        $region63: #{complex_linear.1} parent=15 // pred_check
          %p402 = pneg %p109
        $region64: #{complex_linear.1} parent=15 // pred_check_branch
          %404 = sbr.rel (%p402) target = $region66
        $region65: #{complex_linear.1} parent=15 // pred_region
          %s405 = sand.u32 %s99, 1
          %s406 = sand.u32 %s99, 1
          %s407 = smul.addr %s406, 512
          %s408 = scalar_lea.vmem [#allocation6], %s407
          %s409 = smul.u32 32, %s21
          %s410 = smul.u32 2, %s20
          %s411 = smul.addr %s409, 4
          %s412 = sadd.s32 %s410, %s411
          %s413 = smul.addr %s412, 8
          %s414 = scalar_lea.vmem %s2, %s413
          // Predicated region
          $region67: #{complex_linear.1} parent=65 // pred_check
            _
          $region68: #{complex_linear.1} parent=65 // pred_check_branch
            %416 = sbr.rel (0) target = $region70
          $region69: #{complex_linear.1} parent=65 // pred_region
            // Predicated region
            $region71: #{complex_linear.1} parent=69 // pred_check
              _
            $region72: #{complex_linear.1} parent=69 // pred_check_branch
              %418 = sbr.rel (0) target = $region74
            $region73: #{complex_linear.1} parent=69 // pred_region
              loop: start=0, step=1, limit=1
              $region75: #{complex_linear.1} parent=73 // loop_pre_header
                _
              $region76: #{complex_linear.1} parent=73 // loop_header
                %s420 = sphi 0, %s424
                %p421 = scmp.ge.s32.totalorder %s420, 1
                %s425 = sphi %s414, %s414
                %s426 = sphi %s408, %s408
              $region77: #{complex_linear.1} parent=73 // loop_header_branch
                %423 = sbr.rel (%p421) target = $region81
              $region78: #{complex_linear.1} parent=73 // loop_body
                %v427 = vld [vmem:[%s425] sm:$0xff]
                %428 = vst [vmem:[%s426] sm:$0xff] %v427
                %v429 = vld [vmem:[%s425 + $0x8] sm:$0xff]
                %430 = vst [vmem:[%s426 + $0x8] sm:$0xff] %v429
                %v431 = vld [vmem:[%s425 + $0x20] sm:$0xff]
                %432 = vst [vmem:[%s426 + $0x10] sm:$0xff] %v431
                %v433 = vld [vmem:[%s425 + $0x28] sm:$0xff]
                %434 = vst [vmem:[%s426 + $0x18] sm:$0xff] %v433
                %v435 = vld [vmem:[%s425 + $0x40] sm:$0xff]
                %436 = vst [vmem:[%s426 + $0x20] sm:$0xff] %v435
                %v437 = vld [vmem:[%s425 + $0x48] sm:$0xff]
                %438 = vst [vmem:[%s426 + $0x28] sm:$0xff] %v437
                %v439 = vld [vmem:[%s425 + $0x60] sm:$0xff]
                %440 = vst [vmem:[%s426 + $0x30] sm:$0xff] %v439
                %v441 = vld [vmem:[%s425 + $0x68] sm:$0xff]
                %442 = vst [vmem:[%s426 + $0x38] sm:$0xff] %v441
                %v443 = vld [vmem:[%s425 + $0x80] sm:$0xff]
                %444 = vst [vmem:[%s426 + $0x40] sm:$0xff] %v443
                %v445 = vld [vmem:[%s425 + $0x88] sm:$0xff]
                %446 = vst [vmem:[%s426 + $0x48] sm:$0xff] %v445
                %v447 = vld [vmem:[%s425 + $0xa0] sm:$0xff]
                %448 = vst [vmem:[%s426 + $0x50] sm:$0xff] %v447
                %v449 = vld [vmem:[%s425 + $0xa8] sm:$0xff]
                %450 = vst [vmem:[%s426 + $0x58] sm:$0xff] %v449
                %v451 = vld [vmem:[%s425 + $0xc0] sm:$0xff]
                %452 = vst [vmem:[%s426 + $0x60] sm:$0xff] %v451
                %v453 = vld [vmem:[%s425 + $0xc8] sm:$0xff]
                %454 = vst [vmem:[%s426 + $0x68] sm:$0xff] %v453
                %v455 = vld [vmem:[%s425 + $0xe0] sm:$0xff]
                %456 = vst [vmem:[%s426 + $0x70] sm:$0xff] %v455
                %v457 = vld [vmem:[%s425 + $0xe8] sm:$0xff]
                %458 = vst [vmem:[%s426 + $0x78] sm:$0xff] %v457
                %v459 = vld [vmem:[%s425 + $0x100] sm:$0xff]
                %460 = vst [vmem:[%s426 + $0x80] sm:$0xff] %v459
                %v461 = vld [vmem:[%s425 + $0x108] sm:$0xff]
                %462 = vst [vmem:[%s426 + $0x88] sm:$0xff] %v461
                %v463 = vld [vmem:[%s425 + $0x120] sm:$0xff]
                %464 = vst [vmem:[%s426 + $0x90] sm:$0xff] %v463
                %v465 = vld [vmem:[%s425 + $0x128] sm:$0xff]
                %466 = vst [vmem:[%s426 + $0x98] sm:$0xff] %v465
                %v467 = vld [vmem:[%s425 + $0x140] sm:$0xff]
                %468 = vst [vmem:[%s426 + $0xa0] sm:$0xff] %v467
                %v469 = vld [vmem:[%s425 + $0x148] sm:$0xff]
                %470 = vst [vmem:[%s426 + $0xa8] sm:$0xff] %v469
                %v471 = vld [vmem:[%s425 + $0x160] sm:$0xff]
                %472 = vst [vmem:[%s426 + $0xb0] sm:$0xff] %v471
                %v473 = vld [vmem:[%s425 + $0x168] sm:$0xff]
                %474 = vst [vmem:[%s426 + $0xb8] sm:$0xff] %v473
                %v475 = vld [vmem:[%s425 + $0x180] sm:$0xff]
                %476 = vst [vmem:[%s426 + $0xc0] sm:$0xff] %v475
                %v477 = vld [vmem:[%s425 + $0x188] sm:$0xff]
                %478 = vst [vmem:[%s426 + $0xc8] sm:$0xff] %v477
                %v479 = vld [vmem:[%s425 + $0x1a0] sm:$0xff]
                %480 = vst [vmem:[%s426 + $0xd0] sm:$0xff] %v479
                %v481 = vld [vmem:[%s425 + $0x1a8] sm:$0xff]
                %482 = vst [vmem:[%s426 + $0xd8] sm:$0xff] %v481
                %v483 = vld [vmem:[%s425 + $0x1c0] sm:$0xff]
                %484 = vst [vmem:[%s426 + $0xe0] sm:$0xff] %v483
                %v485 = vld [vmem:[%s425 + $0x1c8] sm:$0xff]
                %486 = vst [vmem:[%s426 + $0xe8] sm:$0xff] %v485
                %v487 = vld [vmem:[%s425 + $0x1e0] sm:$0xff]
                %488 = vst [vmem:[%s426 + $0xf0] sm:$0xff] %v487
                %v489 = vld [vmem:[%s425 + $0x1e8] sm:$0xff]
                %490 = vst [vmem:[%s426 + $0xf8] sm:$0xff] %v489
                %v491 = vld [vmem:[%s425 + $0x200] sm:$0xff]
                %492 = vst [vmem:[%s426 + $0x100] sm:$0xff] %v491
                %v493 = vld [vmem:[%s425 + $0x208] sm:$0xff]
                %494 = vst [vmem:[%s426 + $0x108] sm:$0xff] %v493
                %v495 = vld [vmem:[%s425 + $0x220] sm:$0xff]
                %496 = vst [vmem:[%s426 + $0x110] sm:$0xff] %v495
                %v497 = vld [vmem:[%s425 + $0x228] sm:$0xff]
                %498 = vst [vmem:[%s426 + $0x118] sm:$0xff] %v497
                %v499 = vld [vmem:[%s425 + $0x240] sm:$0xff]
                %500 = vst [vmem:[%s426 + $0x120] sm:$0xff] %v499
                %v501 = vld [vmem:[%s425 + $0x248] sm:$0xff]
                %502 = vst [vmem:[%s426 + $0x128] sm:$0xff] %v501
                %v503 = vld [vmem:[%s425 + $0x260] sm:$0xff]
                %504 = vst [vmem:[%s426 + $0x130] sm:$0xff] %v503
                %v505 = vld [vmem:[%s425 + $0x268] sm:$0xff]
                %506 = vst [vmem:[%s426 + $0x138] sm:$0xff] %v505
                %v507 = vld [vmem:[%s425 + $0x280] sm:$0xff]
                %508 = vst [vmem:[%s426 + $0x140] sm:$0xff] %v507
                %v509 = vld [vmem:[%s425 + $0x288] sm:$0xff]
                %510 = vst [vmem:[%s426 + $0x148] sm:$0xff] %v509
                %v511 = vld [vmem:[%s425 + $0x2a0] sm:$0xff]
                %512 = vst [vmem:[%s426 + $0x150] sm:$0xff] %v511
                %v513 = vld [vmem:[%s425 + $0x2a8] sm:$0xff]
                %514 = vst [vmem:[%s426 + $0x158] sm:$0xff] %v513
                %v515 = vld [vmem:[%s425 + $0x2c0] sm:$0xff]
                %516 = vst [vmem:[%s426 + $0x160] sm:$0xff] %v515
                %v517 = vld [vmem:[%s425 + $0x2c8] sm:$0xff]
                %518 = vst [vmem:[%s426 + $0x168] sm:$0xff] %v517
                %v519 = vld [vmem:[%s425 + $0x2e0] sm:$0xff]
                %520 = vst [vmem:[%s426 + $0x170] sm:$0xff] %v519
                %v521 = vld [vmem:[%s425 + $0x2e8] sm:$0xff]
                %522 = vst [vmem:[%s426 + $0x178] sm:$0xff] %v521
                %v523 = vld [vmem:[%s425 + $0x300] sm:$0xff]
                %524 = vst [vmem:[%s426 + $0x180] sm:$0xff] %v523
                %v525 = vld [vmem:[%s425 + $0x308] sm:$0xff]
                %526 = vst [vmem:[%s426 + $0x188] sm:$0xff] %v525
                %v527 = vld [vmem:[%s425 + $0x320] sm:$0xff]
                %528 = vst [vmem:[%s426 + $0x190] sm:$0xff] %v527
                %v529 = vld [vmem:[%s425 + $0x328] sm:$0xff]
                %530 = vst [vmem:[%s426 + $0x198] sm:$0xff] %v529
                %v531 = vld [vmem:[%s425 + $0x340] sm:$0xff]
                %532 = vst [vmem:[%s426 + $0x1a0] sm:$0xff] %v531
                %v533 = vld [vmem:[%s425 + $0x348] sm:$0xff]
                %534 = vst [vmem:[%s426 + $0x1a8] sm:$0xff] %v533
                %v535 = vld [vmem:[%s425 + $0x360] sm:$0xff]
                %536 = vst [vmem:[%s426 + $0x1b0] sm:$0xff] %v535
                %v537 = vld [vmem:[%s425 + $0x368] sm:$0xff]
                %538 = vst [vmem:[%s426 + $0x1b8] sm:$0xff] %v537
                %v539 = vld [vmem:[%s425 + $0x380] sm:$0xff]
                %540 = vst [vmem:[%s426 + $0x1c0] sm:$0xff] %v539
                %v541 = vld [vmem:[%s425 + $0x388] sm:$0xff]
                %542 = vst [vmem:[%s426 + $0x1c8] sm:$0xff] %v541
                %v543 = vld [vmem:[%s425 + $0x3a0] sm:$0xff]
                %544 = vst [vmem:[%s426 + $0x1d0] sm:$0xff] %v543
                %v545 = vld [vmem:[%s425 + $0x3a8] sm:$0xff]
                %546 = vst [vmem:[%s426 + $0x1d8] sm:$0xff] %v545
                %v547 = vld [vmem:[%s425 + $0x3c0] sm:$0xff]
                %548 = vst [vmem:[%s426 + $0x1e0] sm:$0xff] %v547
                %v549 = vld [vmem:[%s425 + $0x3c8] sm:$0xff]
                %550 = vst [vmem:[%s426 + $0x1e8] sm:$0xff] %v549
                %v551 = vld [vmem:[%s425 + $0x3e0] sm:$0xff]
                %552 = vst [vmem:[%s426 + $0x1f0] sm:$0xff] %v551
                %v553 = vld [vmem:[%s425 + $0x3e8] sm:$0xff]
                %554 = vst [vmem:[%s426 + $0x1f8] sm:$0xff] %v553
              $region79: #{complex_linear.1} parent=73 // loop_footer
                %s424 = sadd.s32 1, %s420
              $region80: #{complex_linear.1} parent=73 // loop_footer_branch
                %419 = sbr.rel target = $region76
              $region81: #{complex_linear.1} parent=73 // loop_exit
                _
            $region74: #{complex_linear.1} parent=69 // pred_fallthru
              _
            // Predicated region
            $region82: #{complex_linear.1} parent=69 // pred_check
              _
            $region83: #{complex_linear.1} parent=69 // pred_check_branch
              %556 = sbr.rel target = $region85
            $region84: #{complex_linear.1} parent=69 // pred_region
              _
            $region85: #{complex_linear.1} parent=69 // pred_fallthru
              _
          $region70: #{complex_linear.1} parent=65 // pred_fallthru
            _
          %557 = vnop
        $region66: #{complex_linear.1} parent=15 // pred_fallthru
          _
        // Predicated region
        $region86: #{complex_linear.1} parent=15 // pred_check
          %p558 = pneg %p137
        $region87: #{complex_linear.1} parent=15 // pred_check_branch
          %560 = sbr.rel (%p558) target = $region89
        $region88: #{complex_linear.1} parent=15 // pred_region
          %s561 = sand.u32 %s127, 1
          %s562 = sand.u32 %s127, 1
          %s563 = smul.addr %s562, 512
          %s564 = scalar_lea.vmem [#allocation7], %s563
          %s565 = smul.u32 32, %s21
          %s566 = smul.u32 2, %s20
          %s567 = smul.addr %s565, 4
          %s568 = sadd.s32 %s566, %s567
          %s569 = smul.addr %s568, 8
          %s570 = scalar_lea.vmem %s3, %s569
          // Predicated region
          $region90: #{complex_linear.1} parent=88 // pred_check
            _
          $region91: #{complex_linear.1} parent=88 // pred_check_branch
            %572 = sbr.rel (0) target = $region93
          $region92: #{complex_linear.1} parent=88 // pred_region
            // Predicated region
            $region94: #{complex_linear.1} parent=92 // pred_check
              _
            $region95: #{complex_linear.1} parent=92 // pred_check_branch
              %574 = sbr.rel (0) target = $region97
            $region96: #{complex_linear.1} parent=92 // pred_region
              loop: start=0, step=1, limit=1
              $region98: #{complex_linear.1} parent=96 // loop_pre_header
                _
              $region99: #{complex_linear.1} parent=96 // loop_header
                %s576 = sphi 0, %s580
                %p577 = scmp.ge.s32.totalorder %s576, 1
                %s581 = sphi %s570, %s570
                %s582 = sphi %s564, %s564
              $region100: #{complex_linear.1} parent=96 // loop_header_branch
                %579 = sbr.rel (%p577) target = $region104
              $region101: #{complex_linear.1} parent=96 // loop_body
                %v583 = vld [vmem:[%s581] sm:$0xff]
                %584 = vst [vmem:[%s582] sm:$0xff] %v583
                %v585 = vld [vmem:[%s581 + $0x8] sm:$0xff]
                %586 = vst [vmem:[%s582 + $0x8] sm:$0xff] %v585
                %v587 = vld [vmem:[%s581 + $0x20] sm:$0xff]
                %588 = vst [vmem:[%s582 + $0x10] sm:$0xff] %v587
                %v589 = vld [vmem:[%s581 + $0x28] sm:$0xff]
                %590 = vst [vmem:[%s582 + $0x18] sm:$0xff] %v589
                %v591 = vld [vmem:[%s581 + $0x40] sm:$0xff]
                %592 = vst [vmem:[%s582 + $0x20] sm:$0xff] %v591
                %v593 = vld [vmem:[%s581 + $0x48] sm:$0xff]
                %594 = vst [vmem:[%s582 + $0x28] sm:$0xff] %v593
                %v595 = vld [vmem:[%s581 + $0x60] sm:$0xff]
                %596 = vst [vmem:[%s582 + $0x30] sm:$0xff] %v595
                %v597 = vld [vmem:[%s581 + $0x68] sm:$0xff]
                %598 = vst [vmem:[%s582 + $0x38] sm:$0xff] %v597
                %v599 = vld [vmem:[%s581 + $0x80] sm:$0xff]
                %600 = vst [vmem:[%s582 + $0x40] sm:$0xff] %v599
                %v601 = vld [vmem:[%s581 + $0x88] sm:$0xff]
                %602 = vst [vmem:[%s582 + $0x48] sm:$0xff] %v601
                %v603 = vld [vmem:[%s581 + $0xa0] sm:$0xff]
                %604 = vst [vmem:[%s582 + $0x50] sm:$0xff] %v603
                %v605 = vld [vmem:[%s581 + $0xa8] sm:$0xff]
                %606 = vst [vmem:[%s582 + $0x58] sm:$0xff] %v605
                %v607 = vld [vmem:[%s581 + $0xc0] sm:$0xff]
                %608 = vst [vmem:[%s582 + $0x60] sm:$0xff] %v607
                %v609 = vld [vmem:[%s581 + $0xc8] sm:$0xff]
                %610 = vst [vmem:[%s582 + $0x68] sm:$0xff] %v609
                %v611 = vld [vmem:[%s581 + $0xe0] sm:$0xff]
                %612 = vst [vmem:[%s582 + $0x70] sm:$0xff] %v611
                %v613 = vld [vmem:[%s581 + $0xe8] sm:$0xff]
                %614 = vst [vmem:[%s582 + $0x78] sm:$0xff] %v613
                %v615 = vld [vmem:[%s581 + $0x100] sm:$0xff]
                %616 = vst [vmem:[%s582 + $0x80] sm:$0xff] %v615
                %v617 = vld [vmem:[%s581 + $0x108] sm:$0xff]
                %618 = vst [vmem:[%s582 + $0x88] sm:$0xff] %v617
                %v619 = vld [vmem:[%s581 + $0x120] sm:$0xff]
                %620 = vst [vmem:[%s582 + $0x90] sm:$0xff] %v619
                %v621 = vld [vmem:[%s581 + $0x128] sm:$0xff]
                %622 = vst [vmem:[%s582 + $0x98] sm:$0xff] %v621
                %v623 = vld [vmem:[%s581 + $0x140] sm:$0xff]
                %624 = vst [vmem:[%s582 + $0xa0] sm:$0xff] %v623
                %v625 = vld [vmem:[%s581 + $0x148] sm:$0xff]
                %626 = vst [vmem:[%s582 + $0xa8] sm:$0xff] %v625
                %v627 = vld [vmem:[%s581 + $0x160] sm:$0xff]
                %628 = vst [vmem:[%s582 + $0xb0] sm:$0xff] %v627
                %v629 = vld [vmem:[%s581 + $0x168] sm:$0xff]
                %630 = vst [vmem:[%s582 + $0xb8] sm:$0xff] %v629
                %v631 = vld [vmem:[%s581 + $0x180] sm:$0xff]
                %632 = vst [vmem:[%s582 + $0xc0] sm:$0xff] %v631
                %v633 = vld [vmem:[%s581 + $0x188] sm:$0xff]
                %634 = vst [vmem:[%s582 + $0xc8] sm:$0xff] %v633
                %v635 = vld [vmem:[%s581 + $0x1a0] sm:$0xff]
                %636 = vst [vmem:[%s582 + $0xd0] sm:$0xff] %v635
                %v637 = vld [vmem:[%s581 + $0x1a8] sm:$0xff]
                %638 = vst [vmem:[%s582 + $0xd8] sm:$0xff] %v637
                %v639 = vld [vmem:[%s581 + $0x1c0] sm:$0xff]
                %640 = vst [vmem:[%s582 + $0xe0] sm:$0xff] %v639
                %v641 = vld [vmem:[%s581 + $0x1c8] sm:$0xff]
                %642 = vst [vmem:[%s582 + $0xe8] sm:$0xff] %v641
                %v643 = vld [vmem:[%s581 + $0x1e0] sm:$0xff]
                %644 = vst [vmem:[%s582 + $0xf0] sm:$0xff] %v643
                %v645 = vld [vmem:[%s581 + $0x1e8] sm:$0xff]
                %646 = vst [vmem:[%s582 + $0xf8] sm:$0xff] %v645
                %v647 = vld [vmem:[%s581 + $0x200] sm:$0xff]
                %648 = vst [vmem:[%s582 + $0x100] sm:$0xff] %v647
                %v649 = vld [vmem:[%s581 + $0x208] sm:$0xff]
                %650 = vst [vmem:[%s582 + $0x108] sm:$0xff] %v649
                %v651 = vld [vmem:[%s581 + $0x220] sm:$0xff]
                %652 = vst [vmem:[%s582 + $0x110] sm:$0xff] %v651
                %v653 = vld [vmem:[%s581 + $0x228] sm:$0xff]
                %654 = vst [vmem:[%s582 + $0x118] sm:$0xff] %v653
                %v655 = vld [vmem:[%s581 + $0x240] sm:$0xff]
                %656 = vst [vmem:[%s582 + $0x120] sm:$0xff] %v655
                %v657 = vld [vmem:[%s581 + $0x248] sm:$0xff]
                %658 = vst [vmem:[%s582 + $0x128] sm:$0xff] %v657
                %v659 = vld [vmem:[%s581 + $0x260] sm:$0xff]
                %660 = vst [vmem:[%s582 + $0x130] sm:$0xff] %v659
                %v661 = vld [vmem:[%s581 + $0x268] sm:$0xff]
                %662 = vst [vmem:[%s582 + $0x138] sm:$0xff] %v661
                %v663 = vld [vmem:[%s581 + $0x280] sm:$0xff]
                %664 = vst [vmem:[%s582 + $0x140] sm:$0xff] %v663
                %v665 = vld [vmem:[%s581 + $0x288] sm:$0xff]
                %666 = vst [vmem:[%s582 + $0x148] sm:$0xff] %v665
                %v667 = vld [vmem:[%s581 + $0x2a0] sm:$0xff]
                %668 = vst [vmem:[%s582 + $0x150] sm:$0xff] %v667
                %v669 = vld [vmem:[%s581 + $0x2a8] sm:$0xff]
                %670 = vst [vmem:[%s582 + $0x158] sm:$0xff] %v669
                %v671 = vld [vmem:[%s581 + $0x2c0] sm:$0xff]
                %672 = vst [vmem:[%s582 + $0x160] sm:$0xff] %v671
                %v673 = vld [vmem:[%s581 + $0x2c8] sm:$0xff]
                %674 = vst [vmem:[%s582 + $0x168] sm:$0xff] %v673
                %v675 = vld [vmem:[%s581 + $0x2e0] sm:$0xff]
                %676 = vst [vmem:[%s582 + $0x170] sm:$0xff] %v675
                %v677 = vld [vmem:[%s581 + $0x2e8] sm:$0xff]
                %678 = vst [vmem:[%s582 + $0x178] sm:$0xff] %v677
                %v679 = vld [vmem:[%s581 + $0x300] sm:$0xff]
                %680 = vst [vmem:[%s582 + $0x180] sm:$0xff] %v679
                %v681 = vld [vmem:[%s581 + $0x308] sm:$0xff]
                %682 = vst [vmem:[%s582 + $0x188] sm:$0xff] %v681
                %v683 = vld [vmem:[%s581 + $0x320] sm:$0xff]
                %684 = vst [vmem:[%s582 + $0x190] sm:$0xff] %v683
                %v685 = vld [vmem:[%s581 + $0x328] sm:$0xff]
                %686 = vst [vmem:[%s582 + $0x198] sm:$0xff] %v685
                %v687 = vld [vmem:[%s581 + $0x340] sm:$0xff]
                %688 = vst [vmem:[%s582 + $0x1a0] sm:$0xff] %v687
                %v689 = vld [vmem:[%s581 + $0x348] sm:$0xff]
                %690 = vst [vmem:[%s582 + $0x1a8] sm:$0xff] %v689
                %v691 = vld [vmem:[%s581 + $0x360] sm:$0xff]
                %692 = vst [vmem:[%s582 + $0x1b0] sm:$0xff] %v691
                %v693 = vld [vmem:[%s581 + $0x368] sm:$0xff]
                %694 = vst [vmem:[%s582 + $0x1b8] sm:$0xff] %v693
                %v695 = vld [vmem:[%s581 + $0x380] sm:$0xff]
                %696 = vst [vmem:[%s582 + $0x1c0] sm:$0xff] %v695
                %v697 = vld [vmem:[%s581 + $0x388] sm:$0xff]
                %698 = vst [vmem:[%s582 + $0x1c8] sm:$0xff] %v697
                %v699 = vld [vmem:[%s581 + $0x3a0] sm:$0xff]
                %700 = vst [vmem:[%s582 + $0x1d0] sm:$0xff] %v699
                %v701 = vld [vmem:[%s581 + $0x3a8] sm:$0xff]
                %702 = vst [vmem:[%s582 + $0x1d8] sm:$0xff] %v701
                %v703 = vld [vmem:[%s581 + $0x3c0] sm:$0xff]
                %704 = vst [vmem:[%s582 + $0x1e0] sm:$0xff] %v703
                %v705 = vld [vmem:[%s581 + $0x3c8] sm:$0xff]
                %706 = vst [vmem:[%s582 + $0x1e8] sm:$0xff] %v705
                %v707 = vld [vmem:[%s581 + $0x3e0] sm:$0xff]
                %708 = vst [vmem:[%s582 + $0x1f0] sm:$0xff] %v707
                %v709 = vld [vmem:[%s581 + $0x3e8] sm:$0xff]
                %710 = vst [vmem:[%s582 + $0x1f8] sm:$0xff] %v709
              $region102: #{complex_linear.1} parent=96 // loop_footer
                %s580 = sadd.s32 1, %s576
              $region103: #{complex_linear.1} parent=96 // loop_footer_branch
                %575 = sbr.rel target = $region99
              $region104: #{complex_linear.1} parent=96 // loop_exit
                _
            $region97: #{complex_linear.1} parent=92 // pred_fallthru
              _
            // Predicated region
            $region105: #{complex_linear.1} parent=92 // pred_check
              _
            $region106: #{complex_linear.1} parent=92 // pred_check_branch
              %712 = sbr.rel target = $region108
            $region107: #{complex_linear.1} parent=92 // pred_region
              _
            $region108: #{complex_linear.1} parent=92 // pred_fallthru
              _
          $region93: #{complex_linear.1} parent=88 // pred_fallthru
            _
          %713 = vnop
        $region89: #{complex_linear.1} parent=15 // pred_fallthru
          _
      $region16: #{complex_linear.1} parent=5 // pred_fallthru
        _
      %p714 = scmp.le.s32.totalorder 1, %s12
      %p715 = scmp.lt.s32.totalorder %s12, 9
      %p716 = pnand %p714, %p715
      %p717 = pneg %p716
      // Predicated region
      $region109: #{complex_linear.1} parent=5 // pred_check
        _
      $region110: #{complex_linear.1} parent=5 // pred_check_branch
        %719 = sbr.rel (%p716) target = $region112
      $region111: #{complex_linear.1} parent=5 // pred_region
        %s720 = ssub.s32 %s12, 1
        %s721 = sand.u32 %s46, 1
        %s722 = sand.u32 %s46, 1
        %s723 = smul.addr %s722, 256
        %s724 = scalar_lea.vmem [#allocation4], %s723
        // Predicated region
        $region113: #{complex_linear.1} parent=111 // pred_check
          %p725 = pneg %p59
        $region114: #{complex_linear.1} parent=111 // pred_check_branch
          %727 = sbr.rel (%p725) target = $region116
        $region115: #{complex_linear.1} parent=111 // pred_region
          _
        $region116: #{complex_linear.1} parent=111 // pred_fallthru
          _
        %s728 = sand.u32 %s74, 1
        %s729 = sand.u32 %s74, 1
        %s730 = smul.addr %s729, 256
        %s731 = scalar_lea.vmem [#allocation5], %s730
        // Predicated region
        $region117: #{complex_linear.1} parent=111 // pred_check
          %p732 = pneg %p87
        $region118: #{complex_linear.1} parent=111 // pred_check_branch
          %734 = sbr.rel (%p732) target = $region120
        $region119: #{complex_linear.1} parent=111 // pred_region
          _
        $region120: #{complex_linear.1} parent=111 // pred_fallthru
          _
        %s735 = sand.u32 %s102, 1
        %s736 = sand.u32 %s102, 1
        %s737 = smul.addr %s736, 512
        %s738 = scalar_lea.vmem [#allocation6], %s737
        // Predicated region
        $region121: #{complex_linear.1} parent=111 // pred_check
          %p739 = pneg %p115
        $region122: #{complex_linear.1} parent=111 // pred_check_branch
          %741 = sbr.rel (%p739) target = $region124
        $region123: #{complex_linear.1} parent=111 // pred_region
          _
        $region124: #{complex_linear.1} parent=111 // pred_fallthru
          _
        %s742 = sand.u32 %s130, 1
        %s743 = sand.u32 %s130, 1
        %s744 = smul.addr %s743, 512
        %s745 = scalar_lea.vmem [#allocation7], %s744
        // Predicated region
        $region125: #{complex_linear.1} parent=111 // pred_check
          %p746 = pneg %p143
        $region126: #{complex_linear.1} parent=111 // pred_check_branch
          %748 = sbr.rel (%p746) target = $region128
        $region127: #{complex_linear.1} parent=111 // pred_region
          _
        $region128: #{complex_linear.1} parent=111 // pred_fallthru
          _
        %s749 = sand.u32 %s46, 1
        %s750 = sand.u32 %s46, 1
        %s751 = smul.addr %s750, 256
        %s752 = scalar_lea.vmem [#allocation4], %s751
        %p753 = pneg %p59
        %p754 = pneg %p56
        %s755 = sand.u32 %s74, 1
        %s756 = sand.u32 %s74, 1
        %s757 = smul.addr %s756, 256
        %s758 = scalar_lea.vmem [#allocation5], %s757
        %p759 = pneg %p87
        %p760 = pneg %p84
        %s761 = sand.u32 %s102, 1
        %s762 = sand.u32 %s102, 1
        %s763 = smul.addr %s762, 512
        %s764 = scalar_lea.vmem [#allocation6], %s763
        %p765 = pneg %p115
        %p766 = pneg %p112
        %s767 = sand.u32 %s130, 1
        %s768 = sand.u32 %s130, 1
        %s769 = smul.addr %s768, 512
        %s770 = scalar_lea.vmem [#allocation7], %s769
        %p771 = pneg %p143
        %p772 = pneg %p140
        %p773 = pneg %p171
        %p774 = pneg %p168
        %s775 = sand.u32 %s158, 1
        %s776 = sand.u32 %s158, 1
        %s777 = smul.addr %s776, 256
        %s778 = scalar_lea.vmem [#allocation8], %s777
        %p779 = pneg %p199
        %p780 = pneg %p196
        %s781 = sand.u32 %s186, 1
        %s782 = sand.u32 %s186, 1
        %s783 = smul.addr %s782, 256
        %s784 = scalar_lea.vmem [#allocation9], %s783
        %s785 = smul.u32 16, %s22
        %s786 = smul.u32 2, %s24
        %s787 = smul.u32 16, %s22
        %s788 = smul.u32 2, %s24
        %s789 = smul.u32 32, %s24
        %s790 = smul.u32 2, %s23
        %s791 = smul.u32 32, %s24
        %s792 = smul.u32 2, %s23
        %s793 = smul.u32 16, %s22
        %s794 = smul.u32 2, %s23
        %s795 = smul.u32 16, %s22
        %s796 = smul.u32 2, %s23
        %p797 = scmp.eq.s32.totalorder %s24, 0
        // Predicated region
        $region129: #{complex_linear.1} parent=111 // pred_check
          %p798 = pneg %p797
        $region130: #{complex_linear.1} parent=111 // pred_check_branch
          %800 = sbr.rel (%p798) target = $region132
        $region131: #{complex_linear.1} parent=111 // pred_region
          %801 = vst [vmem:[#allocation2] sm:$0xff] 0.0
          %802 = vst [vmem:[#allocation2 + $0x8] sm:$0xff] 0.0
          %803 = vst [vmem:[#allocation2 + $0x10] sm:$0xff] 0.0
          %804 = vst [vmem:[#allocation2 + $0x18] sm:$0xff] 0.0
          %805 = vst [vmem:[#allocation2 + $0x20] sm:$0xff] 0.0
          %806 = vst [vmem:[#allocation2 + $0x28] sm:$0xff] 0.0
          %807 = vst [vmem:[#allocation2 + $0x30] sm:$0xff] 0.0
          %808 = vst [vmem:[#allocation2 + $0x38] sm:$0xff] 0.0
          %809 = vst [vmem:[#allocation2 + $0x40] sm:$0xff] 0.0
          %810 = vst [vmem:[#allocation2 + $0x48] sm:$0xff] 0.0
          %811 = vst [vmem:[#allocation2 + $0x50] sm:$0xff] 0.0
          %812 = vst [vmem:[#allocation2 + $0x58] sm:$0xff] 0.0
          %813 = vst [vmem:[#allocation2 + $0x60] sm:$0xff] 0.0
          %814 = vst [vmem:[#allocation2 + $0x68] sm:$0xff] 0.0
          %815 = vst [vmem:[#allocation2 + $0x70] sm:$0xff] 0.0
          %816 = vst [vmem:[#allocation2 + $0x78] sm:$0xff] 0.0
          %817 = vst [vmem:[#allocation2 + $0x80] sm:$0xff] 0.0
          %818 = vst [vmem:[#allocation2 + $0x88] sm:$0xff] 0.0
          %819 = vst [vmem:[#allocation2 + $0x90] sm:$0xff] 0.0
          %820 = vst [vmem:[#allocation2 + $0x98] sm:$0xff] 0.0
          %821 = vst [vmem:[#allocation2 + $0xa0] sm:$0xff] 0.0
          %822 = vst [vmem:[#allocation2 + $0xa8] sm:$0xff] 0.0
          %823 = vst [vmem:[#allocation2 + $0xb0] sm:$0xff] 0.0
          %824 = vst [vmem:[#allocation2 + $0xb8] sm:$0xff] 0.0
          %825 = vst [vmem:[#allocation2 + $0xc0] sm:$0xff] 0.0
          %826 = vst [vmem:[#allocation2 + $0xc8] sm:$0xff] 0.0
          %827 = vst [vmem:[#allocation2 + $0xd0] sm:$0xff] 0.0
          %828 = vst [vmem:[#allocation2 + $0xd8] sm:$0xff] 0.0
          %829 = vst [vmem:[#allocation2 + $0xe0] sm:$0xff] 0.0
          %830 = vst [vmem:[#allocation2 + $0xe8] sm:$0xff] 0.0
          %831 = vst [vmem:[#allocation2 + $0xf0] sm:$0xff] 0.0
          %832 = vst [vmem:[#allocation2 + $0xf8] sm:$0xff] 0.0
          %833 = vst [vmem:[#allocation3] sm:$0xff] 0.0
          %834 = vst [vmem:[#allocation3 + $0x8] sm:$0xff] 0.0
          %835 = vst [vmem:[#allocation3 + $0x10] sm:$0xff] 0.0
          %836 = vst [vmem:[#allocation3 + $0x18] sm:$0xff] 0.0
          %837 = vst [vmem:[#allocation3 + $0x20] sm:$0xff] 0.0
          %838 = vst [vmem:[#allocation3 + $0x28] sm:$0xff] 0.0
          %839 = vst [vmem:[#allocation3 + $0x30] sm:$0xff] 0.0
          %840 = vst [vmem:[#allocation3 + $0x38] sm:$0xff] 0.0
          %841 = vst [vmem:[#allocation3 + $0x40] sm:$0xff] 0.0
          %842 = vst [vmem:[#allocation3 + $0x48] sm:$0xff] 0.0
          %843 = vst [vmem:[#allocation3 + $0x50] sm:$0xff] 0.0
          %844 = vst [vmem:[#allocation3 + $0x58] sm:$0xff] 0.0
          %845 = vst [vmem:[#allocation3 + $0x60] sm:$0xff] 0.0
          %846 = vst [vmem:[#allocation3 + $0x68] sm:$0xff] 0.0
          %847 = vst [vmem:[#allocation3 + $0x70] sm:$0xff] 0.0
          %848 = vst [vmem:[#allocation3 + $0x78] sm:$0xff] 0.0
          %849 = vst [vmem:[#allocation3 + $0x80] sm:$0xff] 0.0
          %850 = vst [vmem:[#allocation3 + $0x88] sm:$0xff] 0.0
          %851 = vst [vmem:[#allocation3 + $0x90] sm:$0xff] 0.0
          %852 = vst [vmem:[#allocation3 + $0x98] sm:$0xff] 0.0
          %853 = vst [vmem:[#allocation3 + $0xa0] sm:$0xff] 0.0
          %854 = vst [vmem:[#allocation3 + $0xa8] sm:$0xff] 0.0
          %855 = vst [vmem:[#allocation3 + $0xb0] sm:$0xff] 0.0
          %856 = vst [vmem:[#allocation3 + $0xb8] sm:$0xff] 0.0
          %857 = vst [vmem:[#allocation3 + $0xc0] sm:$0xff] 0.0
          %858 = vst [vmem:[#allocation3 + $0xc8] sm:$0xff] 0.0
          %859 = vst [vmem:[#allocation3 + $0xd0] sm:$0xff] 0.0
          %860 = vst [vmem:[#allocation3 + $0xd8] sm:$0xff] 0.0
          %861 = vst [vmem:[#allocation3 + $0xe0] sm:$0xff] 0.0
          %862 = vst [vmem:[#allocation3 + $0xe8] sm:$0xff] 0.0
          %863 = vst [vmem:[#allocation3 + $0xf0] sm:$0xff] 0.0
          %864 = vst [vmem:[#allocation3 + $0xf8] sm:$0xff] 0.0
        $region132: #{complex_linear.1} parent=111 // pred_fallthru
          _
        %v865 = vld [vmem:[%s724] sm:$0xff]
        %v866 = vld [vmem:[%s724 + $0x8] sm:$0xff]
        %v867 = vld [vmem:[%s724 + $0x10] sm:$0xff]
        %v868 = vld [vmem:[%s724 + $0x18] sm:$0xff]
        %v869 = vld [vmem:[%s724 + $0x20] sm:$0xff]
        %v870 = vld [vmem:[%s724 + $0x28] sm:$0xff]
        %v871 = vld [vmem:[%s724 + $0x30] sm:$0xff]
        %v872 = vld [vmem:[%s724 + $0x38] sm:$0xff]
        %v873 = vld [vmem:[%s724 + $0x40] sm:$0xff]
        %v874 = vld [vmem:[%s724 + $0x48] sm:$0xff]
        %v875 = vld [vmem:[%s724 + $0x50] sm:$0xff]
        %v876 = vld [vmem:[%s724 + $0x58] sm:$0xff]
        %v877 = vld [vmem:[%s724 + $0x60] sm:$0xff]
        %v878 = vld [vmem:[%s724 + $0x68] sm:$0xff]
        %v879 = vld [vmem:[%s724 + $0x70] sm:$0xff]
        %v880 = vld [vmem:[%s724 + $0x78] sm:$0xff]
        %v881 = vld [vmem:[%s724 + $0x80] sm:$0xff]
        %v882 = vld [vmem:[%s724 + $0x88] sm:$0xff]
        %v883 = vld [vmem:[%s724 + $0x90] sm:$0xff]
        %v884 = vld [vmem:[%s724 + $0x98] sm:$0xff]
        %v885 = vld [vmem:[%s724 + $0xa0] sm:$0xff]
        %v886 = vld [vmem:[%s724 + $0xa8] sm:$0xff]
        %v887 = vld [vmem:[%s724 + $0xb0] sm:$0xff]
        %v888 = vld [vmem:[%s724 + $0xb8] sm:$0xff]
        %v889 = vld [vmem:[%s724 + $0xc0] sm:$0xff]
        %v890 = vld [vmem:[%s724 + $0xc8] sm:$0xff]
        %v891 = vld [vmem:[%s724 + $0xd0] sm:$0xff]
        %v892 = vld [vmem:[%s724 + $0xd8] sm:$0xff]
        %v893 = vld [vmem:[%s724 + $0xe0] sm:$0xff]
        %v894 = vld [vmem:[%s724 + $0xe8] sm:$0xff]
        %v895 = vld [vmem:[%s724 + $0xf0] sm:$0xff]
        %v896 = vld [vmem:[%s724 + $0xf8] sm:$0xff]
        %v897 = vld [vmem:[%s731] sm:$0xff]
        %v898 = vld [vmem:[%s731 + $0x8] sm:$0xff]
        %v899 = vld [vmem:[%s731 + $0x10] sm:$0xff]
        %v900 = vld [vmem:[%s731 + $0x18] sm:$0xff]
        %v901 = vld [vmem:[%s731 + $0x20] sm:$0xff]
        %v902 = vld [vmem:[%s731 + $0x28] sm:$0xff]
        %v903 = vld [vmem:[%s731 + $0x30] sm:$0xff]
        %v904 = vld [vmem:[%s731 + $0x38] sm:$0xff]
        %v905 = vld [vmem:[%s731 + $0x40] sm:$0xff]
        %v906 = vld [vmem:[%s731 + $0x48] sm:$0xff]
        %v907 = vld [vmem:[%s731 + $0x50] sm:$0xff]
        %v908 = vld [vmem:[%s731 + $0x58] sm:$0xff]
        %v909 = vld [vmem:[%s731 + $0x60] sm:$0xff]
        %v910 = vld [vmem:[%s731 + $0x68] sm:$0xff]
        %v911 = vld [vmem:[%s731 + $0x70] sm:$0xff]
        %v912 = vld [vmem:[%s731 + $0x78] sm:$0xff]
        %v913 = vld [vmem:[%s731 + $0x80] sm:$0xff]
        %v914 = vld [vmem:[%s731 + $0x88] sm:$0xff]
        %v915 = vld [vmem:[%s731 + $0x90] sm:$0xff]
        %v916 = vld [vmem:[%s731 + $0x98] sm:$0xff]
        %v917 = vld [vmem:[%s731 + $0xa0] sm:$0xff]
        %v918 = vld [vmem:[%s731 + $0xa8] sm:$0xff]
        %v919 = vld [vmem:[%s731 + $0xb0] sm:$0xff]
        %v920 = vld [vmem:[%s731 + $0xb8] sm:$0xff]
        %v921 = vld [vmem:[%s731 + $0xc0] sm:$0xff]
        %v922 = vld [vmem:[%s731 + $0xc8] sm:$0xff]
        %v923 = vld [vmem:[%s731 + $0xd0] sm:$0xff]
        %v924 = vld [vmem:[%s731 + $0xd8] sm:$0xff]
        %v925 = vld [vmem:[%s731 + $0xe0] sm:$0xff]
        %v926 = vld [vmem:[%s731 + $0xe8] sm:$0xff]
        %v927 = vld [vmem:[%s731 + $0xf0] sm:$0xff]
        %v928 = vld [vmem:[%s731 + $0xf8] sm:$0xff]
        %v929 = vld [vmem:[%s738] sm:$0xff]
        %v930 = vld [vmem:[%s738 + $0x8] sm:$0xff]
        %v931 = vld [vmem:[%s738 + $0x10] sm:$0xff]
        %v932 = vld [vmem:[%s738 + $0x18] sm:$0xff]
        %v933 = vld [vmem:[%s738 + $0x20] sm:$0xff]
        %v934 = vld [vmem:[%s738 + $0x28] sm:$0xff]
        %v935 = vld [vmem:[%s738 + $0x30] sm:$0xff]
        %v936 = vld [vmem:[%s738 + $0x38] sm:$0xff]
        %v937 = vld [vmem:[%s738 + $0x40] sm:$0xff]
        %v938 = vld [vmem:[%s738 + $0x48] sm:$0xff]
        %v939 = vld [vmem:[%s738 + $0x50] sm:$0xff]
        %v940 = vld [vmem:[%s738 + $0x58] sm:$0xff]
        %v941 = vld [vmem:[%s738 + $0x60] sm:$0xff]
        %v942 = vld [vmem:[%s738 + $0x68] sm:$0xff]
        %v943 = vld [vmem:[%s738 + $0x70] sm:$0xff]
        %v944 = vld [vmem:[%s738 + $0x78] sm:$0xff]
        %v945 = vld [vmem:[%s738 + $0x80] sm:$0xff]
        %v946 = vld [vmem:[%s738 + $0x88] sm:$0xff]
        %v947 = vld [vmem:[%s738 + $0x90] sm:$0xff]
        %v948 = vld [vmem:[%s738 + $0x98] sm:$0xff]
        %v949 = vld [vmem:[%s738 + $0xa0] sm:$0xff]
        %v950 = vld [vmem:[%s738 + $0xa8] sm:$0xff]
        %v951 = vld [vmem:[%s738 + $0xb0] sm:$0xff]
        %v952 = vld [vmem:[%s738 + $0xb8] sm:$0xff]
        %v953 = vld [vmem:[%s738 + $0xc0] sm:$0xff]
        %v954 = vld [vmem:[%s738 + $0xc8] sm:$0xff]
        %v955 = vld [vmem:[%s738 + $0xd0] sm:$0xff]
        %v956 = vld [vmem:[%s738 + $0xd8] sm:$0xff]
        %v957 = vld [vmem:[%s738 + $0xe0] sm:$0xff]
        %v958 = vld [vmem:[%s738 + $0xe8] sm:$0xff]
        %v959 = vld [vmem:[%s738 + $0xf0] sm:$0xff]
        %v960 = vld [vmem:[%s738 + $0xf8] sm:$0xff]
        %v961 = vld [vmem:[%s738 + $0x100] sm:$0xff]
        %v962 = vld [vmem:[%s738 + $0x108] sm:$0xff]
        %v963 = vld [vmem:[%s738 + $0x110] sm:$0xff]
        %v964 = vld [vmem:[%s738 + $0x118] sm:$0xff]
        %v965 = vld [vmem:[%s738 + $0x120] sm:$0xff]
        %v966 = vld [vmem:[%s738 + $0x128] sm:$0xff]
        %v967 = vld [vmem:[%s738 + $0x130] sm:$0xff]
        %v968 = vld [vmem:[%s738 + $0x138] sm:$0xff]
        %v969 = vld [vmem:[%s738 + $0x140] sm:$0xff]
        %v970 = vld [vmem:[%s738 + $0x148] sm:$0xff]
        %v971 = vld [vmem:[%s738 + $0x150] sm:$0xff]
        %v972 = vld [vmem:[%s738 + $0x158] sm:$0xff]
        %v973 = vld [vmem:[%s738 + $0x160] sm:$0xff]
        %v974 = vld [vmem:[%s738 + $0x168] sm:$0xff]
        %v975 = vld [vmem:[%s738 + $0x170] sm:$0xff]
        %v976 = vld [vmem:[%s738 + $0x178] sm:$0xff]
        %v977 = vld [vmem:[%s738 + $0x180] sm:$0xff]
        %v978 = vld [vmem:[%s738 + $0x188] sm:$0xff]
        %v979 = vld [vmem:[%s738 + $0x190] sm:$0xff]
        %v980 = vld [vmem:[%s738 + $0x198] sm:$0xff]
        %v981 = vld [vmem:[%s738 + $0x1a0] sm:$0xff]
        %v982 = vld [vmem:[%s738 + $0x1a8] sm:$0xff]
        %v983 = vld [vmem:[%s738 + $0x1b0] sm:$0xff]
        %v984 = vld [vmem:[%s738 + $0x1b8] sm:$0xff]
        %v985 = vld [vmem:[%s738 + $0x1c0] sm:$0xff]
        %v986 = vld [vmem:[%s738 + $0x1c8] sm:$0xff]
        %v987 = vld [vmem:[%s738 + $0x1d0] sm:$0xff]
        %v988 = vld [vmem:[%s738 + $0x1d8] sm:$0xff]
        %v989 = vld [vmem:[%s738 + $0x1e0] sm:$0xff]
        %v990 = vld [vmem:[%s738 + $0x1e8] sm:$0xff]
        %v991 = vld [vmem:[%s738 + $0x1f0] sm:$0xff]
        %v992 = vld [vmem:[%s738 + $0x1f8] sm:$0xff]
        %v993 = vld [vmem:[%s745] sm:$0xff]
        %v994 = vld [vmem:[%s745 + $0x8] sm:$0xff]
        %v995 = vld [vmem:[%s745 + $0x10] sm:$0xff]
        %v996 = vld [vmem:[%s745 + $0x18] sm:$0xff]
        %v997 = vld [vmem:[%s745 + $0x20] sm:$0xff]
        %v998 = vld [vmem:[%s745 + $0x28] sm:$0xff]
        %v999 = vld [vmem:[%s745 + $0x30] sm:$0xff]
        %v1000 = vld [vmem:[%s745 + $0x38] sm:$0xff]
        %v1001 = vld [vmem:[%s745 + $0x40] sm:$0xff]
        %v1002 = vld [vmem:[%s745 + $0x48] sm:$0xff]
        %v1003 = vld [vmem:[%s745 + $0x50] sm:$0xff]
        %v1004 = vld [vmem:[%s745 + $0x58] sm:$0xff]
        %v1005 = vld [vmem:[%s745 + $0x60] sm:$0xff]
        %v1006 = vld [vmem:[%s745 + $0x68] sm:$0xff]
        %v1007 = vld [vmem:[%s745 + $0x70] sm:$0xff]
        %v1008 = vld [vmem:[%s745 + $0x78] sm:$0xff]
        %v1009 = vld [vmem:[%s745 + $0x80] sm:$0xff]
        %v1010 = vld [vmem:[%s745 + $0x88] sm:$0xff]
        %v1011 = vld [vmem:[%s745 + $0x90] sm:$0xff]
        %v1012 = vld [vmem:[%s745 + $0x98] sm:$0xff]
        %v1013 = vld [vmem:[%s745 + $0xa0] sm:$0xff]
        %v1014 = vld [vmem:[%s745 + $0xa8] sm:$0xff]
        %v1015 = vld [vmem:[%s745 + $0xb0] sm:$0xff]
        %v1016 = vld [vmem:[%s745 + $0xb8] sm:$0xff]
        %v1017 = vld [vmem:[%s745 + $0xc0] sm:$0xff]
        %v1018 = vld [vmem:[%s745 + $0xc8] sm:$0xff]
        %v1019 = vld [vmem:[%s745 + $0xd0] sm:$0xff]
        %v1020 = vld [vmem:[%s745 + $0xd8] sm:$0xff]
        %v1021 = vld [vmem:[%s745 + $0xe0] sm:$0xff]
        %v1022 = vld [vmem:[%s745 + $0xe8] sm:$0xff]
        %v1023 = vld [vmem:[%s745 + $0xf0] sm:$0xff]
        %v1024 = vld [vmem:[%s745 + $0xf8] sm:$0xff]
        %v1025 = vld [vmem:[%s745 + $0x100] sm:$0xff]
        %v1026 = vld [vmem:[%s745 + $0x108] sm:$0xff]
        %v1027 = vld [vmem:[%s745 + $0x110] sm:$0xff]
        %v1028 = vld [vmem:[%s745 + $0x118] sm:$0xff]
        %v1029 = vld [vmem:[%s745 + $0x120] sm:$0xff]
        %v1030 = vld [vmem:[%s745 + $0x128] sm:$0xff]
        %v1031 = vld [vmem:[%s745 + $0x130] sm:$0xff]
        %v1032 = vld [vmem:[%s745 + $0x138] sm:$0xff]
        %v1033 = vld [vmem:[%s745 + $0x140] sm:$0xff]
        %v1034 = vld [vmem:[%s745 + $0x148] sm:$0xff]
        %v1035 = vld [vmem:[%s745 + $0x150] sm:$0xff]
        %v1036 = vld [vmem:[%s745 + $0x158] sm:$0xff]
        %v1037 = vld [vmem:[%s745 + $0x160] sm:$0xff]
        %v1038 = vld [vmem:[%s745 + $0x168] sm:$0xff]
        %v1039 = vld [vmem:[%s745 + $0x170] sm:$0xff]
        %v1040 = vld [vmem:[%s745 + $0x178] sm:$0xff]
        %v1041 = vld [vmem:[%s745 + $0x180] sm:$0xff]
        %v1042 = vld [vmem:[%s745 + $0x188] sm:$0xff]
        %v1043 = vld [vmem:[%s745 + $0x190] sm:$0xff]
        %v1044 = vld [vmem:[%s745 + $0x198] sm:$0xff]
        %v1045 = vld [vmem:[%s745 + $0x1a0] sm:$0xff]
        %v1046 = vld [vmem:[%s745 + $0x1a8] sm:$0xff]
        %v1047 = vld [vmem:[%s745 + $0x1b0] sm:$0xff]
        %v1048 = vld [vmem:[%s745 + $0x1b8] sm:$0xff]
        %v1049 = vld [vmem:[%s745 + $0x1c0] sm:$0xff]
        %v1050 = vld [vmem:[%s745 + $0x1c8] sm:$0xff]
        %v1051 = vld [vmem:[%s745 + $0x1d0] sm:$0xff]
        %v1052 = vld [vmem:[%s745 + $0x1d8] sm:$0xff]
        %v1053 = vld [vmem:[%s745 + $0x1e0] sm:$0xff]
        %v1054 = vld [vmem:[%s745 + $0x1e8] sm:$0xff]
        %v1055 = vld [vmem:[%s745 + $0x1f0] sm:$0xff]
        %v1056 = vld [vmem:[%s745 + $0x1f8] sm:$0xff]
        %v1057 = vadd.f32 %v865, %v897
        %v1058 = vadd.f32 %v866, %v898
        %v1059 = vadd.f32 %v867, %v899
        %v1060 = vadd.f32 %v868, %v900
        %v1061 = vadd.f32 %v869, %v901
        %v1062 = vadd.f32 %v870, %v902
        %v1063 = vadd.f32 %v871, %v903
        %v1064 = vadd.f32 %v872, %v904
        %v1065 = vadd.f32 %v873, %v905
        %v1066 = vadd.f32 %v874, %v906
        %v1067 = vadd.f32 %v875, %v907
        %v1068 = vadd.f32 %v876, %v908
        %v1069 = vadd.f32 %v877, %v909
        %v1070 = vadd.f32 %v878, %v910
        %v1071 = vadd.f32 %v879, %v911
        %v1072 = vadd.f32 %v880, %v912
        %v1073 = vadd.f32 %v881, %v913
        %v1074 = vadd.f32 %v882, %v914
        %v1075 = vadd.f32 %v883, %v915
        %v1076 = vadd.f32 %v884, %v916
        %v1077 = vadd.f32 %v885, %v917
        %v1078 = vadd.f32 %v886, %v918
        %v1079 = vadd.f32 %v887, %v919
        %v1080 = vadd.f32 %v888, %v920
        %v1081 = vadd.f32 %v889, %v921
        %v1082 = vadd.f32 %v890, %v922
        %v1083 = vadd.f32 %v891, %v923
        %v1084 = vadd.f32 %v892, %v924
        %v1085 = vadd.f32 %v893, %v925
        %v1086 = vadd.f32 %v894, %v926
        %v1087 = vadd.f32 %v895, %v927
        %v1088 = vadd.f32 %v896, %v928
        %v1089 = vadd.f32 %v929, %v993
        %v1090 = vadd.f32 %v930, %v994
        %v1091 = vadd.f32 %v931, %v995
        %v1092 = vadd.f32 %v932, %v996
        %v1093 = vadd.f32 %v933, %v997
        %v1094 = vadd.f32 %v934, %v998
        %v1095 = vadd.f32 %v935, %v999
        %v1096 = vadd.f32 %v936, %v1000
        %v1097 = vadd.f32 %v937, %v1001
        %v1098 = vadd.f32 %v938, %v1002
        %v1099 = vadd.f32 %v939, %v1003
        %v1100 = vadd.f32 %v940, %v1004
        %v1101 = vadd.f32 %v941, %v1005
        %v1102 = vadd.f32 %v942, %v1006
        %v1103 = vadd.f32 %v943, %v1007
        %v1104 = vadd.f32 %v944, %v1008
        %v1105 = vadd.f32 %v945, %v1009
        %v1106 = vadd.f32 %v946, %v1010
        %v1107 = vadd.f32 %v947, %v1011
        %v1108 = vadd.f32 %v948, %v1012
        %v1109 = vadd.f32 %v949, %v1013
        %v1110 = vadd.f32 %v950, %v1014
        %v1111 = vadd.f32 %v951, %v1015
        %v1112 = vadd.f32 %v952, %v1016
        %v1113 = vadd.f32 %v953, %v1017
        %v1114 = vadd.f32 %v954, %v1018
        %v1115 = vadd.f32 %v955, %v1019
        %v1116 = vadd.f32 %v956, %v1020
        %v1117 = vadd.f32 %v957, %v1021
        %v1118 = vadd.f32 %v958, %v1022
        %v1119 = vadd.f32 %v959, %v1023
        %v1120 = vadd.f32 %v960, %v1024
        %v1121 = vadd.f32 %v961, %v1025
        %v1122 = vadd.f32 %v962, %v1026
        %v1123 = vadd.f32 %v963, %v1027
        %v1124 = vadd.f32 %v964, %v1028
        %v1125 = vadd.f32 %v965, %v1029
        %v1126 = vadd.f32 %v966, %v1030
        %v1127 = vadd.f32 %v967, %v1031
        %v1128 = vadd.f32 %v968, %v1032
        %v1129 = vadd.f32 %v969, %v1033
        %v1130 = vadd.f32 %v970, %v1034
        %v1131 = vadd.f32 %v971, %v1035
        %v1132 = vadd.f32 %v972, %v1036
        %v1133 = vadd.f32 %v973, %v1037
        %v1134 = vadd.f32 %v974, %v1038
        %v1135 = vadd.f32 %v975, %v1039
        %v1136 = vadd.f32 %v976, %v1040
        %v1137 = vadd.f32 %v977, %v1041
        %v1138 = vadd.f32 %v978, %v1042
        %v1139 = vadd.f32 %v979, %v1043
        %v1140 = vadd.f32 %v980, %v1044
        %v1141 = vadd.f32 %v981, %v1045
        %v1142 = vadd.f32 %v982, %v1046
        %v1143 = vadd.f32 %v983, %v1047
        %v1144 = vadd.f32 %v984, %v1048
        %v1145 = vadd.f32 %v985, %v1049
        %v1146 = vadd.f32 %v986, %v1050
        %v1147 = vadd.f32 %v987, %v1051
        %v1148 = vadd.f32 %v988, %v1052
        %v1149 = vadd.f32 %v989, %v1053
        %v1150 = vadd.f32 %v990, %v1054
        %v1151 = vadd.f32 %v991, %v1055
        %v1152 = vadd.f32 %v992, %v1056
        %1153 = vmatprep.subr.mxu0 %v960
        %1154 = vmatpush1.msra.mxu0 %v959
        %1155 = vmatprep.subr.mxu0 %v958
        %1156 = vmatpush1.msra.mxu0 %v957
        %1157 = vmatprep.subr.mxu0 %v956
        %1158 = vmatpush1.msra.mxu0 %v955
        %1159 = vmatprep.subr.mxu0 %v954
        %1160 = vmatpush1.msra.mxu0 %v953
        %1161 = vmatprep.subr.mxu0 %v952
        %1162 = vmatpush1.msra.mxu0 %v951
        %1163 = vmatprep.subr.mxu0 %v950
        %1164 = vmatpush1.msra.mxu0 %v949
        %1165 = vmatprep.subr.mxu0 %v948
        %1166 = vmatpush1.msra.mxu0 %v947
        %1167 = vmatprep.subr.mxu0 %v946
        %1168 = vmatpush1.msra.mxu0 %v945
        %1169 = vmatprep.subr.mxu0 %v944
        %1170 = vmatpush1.msra.mxu0 %v943
        %1171 = vmatprep.subr.mxu0 %v942
        %1172 = vmatpush1.msra.mxu0 %v941
        %1173 = vmatprep.subr.mxu0 %v940
        %1174 = vmatpush1.msra.mxu0 %v939
        %1175 = vmatprep.subr.mxu0 %v938
        %1176 = vmatpush1.msra.mxu0 %v937
        %1177 = vmatprep.subr.mxu0 %v936
        %1178 = vmatpush1.msra.mxu0 %v935
        %1179 = vmatprep.subr.mxu0 %v934
        %1180 = vmatpush1.msra.mxu0 %v933
        %1181 = vmatprep.subr.mxu0 %v932
        %1182 = vmatpush1.msra.mxu0 %v931
        %1183 = vmatprep.subr.mxu0 %v930
        %1184 = vmatpush1.msra.mxu0 %v929
        %1185 = vmatprep.subr.mxu0 %v992
        %1186 = vmatpush2.msra.mxu0 %v991
        %1187 = vmatprep.subr.mxu0 %v990
        %1188 = vmatpush2.msra.mxu0 %v989
        %1189 = vmatprep.subr.mxu0 %v988
        %1190 = vmatpush2.msra.mxu0 %v987
        %1191 = vmatprep.subr.mxu0 %v986
        %1192 = vmatpush2.msra.mxu0 %v985
        %1193 = vmatprep.subr.mxu0 %v984
        %1194 = vmatpush2.msra.mxu0 %v983
        %1195 = vmatprep.subr.mxu0 %v982
        %1196 = vmatpush2.msra.mxu0 %v981
        %1197 = vmatprep.subr.mxu0 %v980
        %1198 = vmatpush2.msra.mxu0 %v979
        %1199 = vmatprep.subr.mxu0 %v978
        %1200 = vmatpush2.msra.mxu0 %v977
        %1201 = vmatprep.subr.mxu0 %v976
        %1202 = vmatpush2.msra.mxu0 %v975
        %1203 = vmatprep.subr.mxu0 %v974
        %1204 = vmatpush2.msra.mxu0 %v973
        %1205 = vmatprep.subr.mxu0 %v972
        %1206 = vmatpush2.msra.mxu0 %v971
        %1207 = vmatprep.subr.mxu0 %v970
        %1208 = vmatpush2.msra.mxu0 %v969
        %1209 = vmatprep.subr.mxu0 %v968
        %1210 = vmatpush2.msra.mxu0 %v967
        %1211 = vmatprep.subr.mxu0 %v966
        %1212 = vmatpush2.msra.mxu0 %v965
        %1213 = vmatprep.subr.mxu0 %v964
        %1214 = vmatpush2.msra.mxu0 %v963
        %1215 = vmatprep.subr.mxu0 %v962
        %1216 = vmatpush2.msra.mxu0 %v961
        %1217 = vmatprep.mubr.f32.mxu0 %v866
        %1218 = vmatmul.mubr.f32.gmra.mxu0 %v865
        %v1219 = vpop.f32.mrf.mxu0
        %v1220 = vadd.f32 0.0, %v1219
        %v1221 = vpop.f32.mrf.mxu0
        %v1222 = vadd.f32 0.0, %v1221
        %1223 = vmatprep.mubr.f32.mxu0 %v868
        %1224 = vmatmul.mubr.f32.gmra.mxu0 %v867
        %v1225 = vpop.f32.mrf.mxu0
        %v1226 = vadd.f32 0.0, %v1225
        %v1227 = vpop.f32.mrf.mxu0
        %v1228 = vadd.f32 0.0, %v1227
        %1229 = vmatprep.mubr.f32.mxu0 %v870
        %1230 = vmatmul.mubr.f32.gmra.mxu0 %v869
        %v1231 = vpop.f32.mrf.mxu0
        %v1232 = vadd.f32 0.0, %v1231
        %v1233 = vpop.f32.mrf.mxu0
        %v1234 = vadd.f32 0.0, %v1233
        %1235 = vmatprep.mubr.f32.mxu0 %v872
        %1236 = vmatmul.mubr.f32.gmra.mxu0 %v871
        %v1237 = vpop.f32.mrf.mxu0
        %v1238 = vadd.f32 0.0, %v1237
        %v1239 = vpop.f32.mrf.mxu0
        %v1240 = vadd.f32 0.0, %v1239
        %1241 = vmatprep.mubr.f32.mxu0 %v874
        %1242 = vmatmul.mubr.f32.gmra.mxu0 %v873
        %v1243 = vpop.f32.mrf.mxu0
        %v1244 = vadd.f32 0.0, %v1243
        %v1245 = vpop.f32.mrf.mxu0
        %v1246 = vadd.f32 0.0, %v1245
        %1247 = vmatprep.mubr.f32.mxu0 %v876
        %1248 = vmatmul.mubr.f32.gmra.mxu0 %v875
        %v1249 = vpop.f32.mrf.mxu0
        %v1250 = vadd.f32 0.0, %v1249
        %v1251 = vpop.f32.mrf.mxu0
        %v1252 = vadd.f32 0.0, %v1251
        %1253 = vmatprep.mubr.f32.mxu0 %v878
        %1254 = vmatmul.mubr.f32.gmra.mxu0 %v877
        %v1255 = vpop.f32.mrf.mxu0
        %v1256 = vadd.f32 0.0, %v1255
        %v1257 = vpop.f32.mrf.mxu0
        %v1258 = vadd.f32 0.0, %v1257
        %1259 = vmatprep.mubr.f32.mxu0 %v880
        %1260 = vmatmul.mubr.f32.gmra.mxu0 %v879
        %v1261 = vpop.f32.mrf.mxu0
        %v1262 = vadd.f32 0.0, %v1261
        %v1263 = vpop.f32.mrf.mxu0
        %v1264 = vadd.f32 0.0, %v1263
        %1265 = vmatprep.mubr.f32.mxu0 %v882
        %1266 = vmatmul.mubr.f32.gmra.mxu0 %v881
        %v1267 = vpop.f32.mrf.mxu0
        %v1268 = vadd.f32 0.0, %v1267
        %v1269 = vpop.f32.mrf.mxu0
        %v1270 = vadd.f32 0.0, %v1269
        %1271 = vmatprep.mubr.f32.mxu0 %v884
        %1272 = vmatmul.mubr.f32.gmra.mxu0 %v883
        %v1273 = vpop.f32.mrf.mxu0
        %v1274 = vadd.f32 0.0, %v1273
        %v1275 = vpop.f32.mrf.mxu0
        %v1276 = vadd.f32 0.0, %v1275
        %1277 = vmatprep.mubr.f32.mxu0 %v886
        %1278 = vmatmul.mubr.f32.gmra.mxu0 %v885
        %v1279 = vpop.f32.mrf.mxu0
        %v1280 = vadd.f32 0.0, %v1279
        %v1281 = vpop.f32.mrf.mxu0
        %v1282 = vadd.f32 0.0, %v1281
        %1283 = vmatprep.mubr.f32.mxu0 %v888
        %1284 = vmatmul.mubr.f32.gmra.mxu0 %v887
        %v1285 = vpop.f32.mrf.mxu0
        %v1286 = vadd.f32 0.0, %v1285
        %v1287 = vpop.f32.mrf.mxu0
        %v1288 = vadd.f32 0.0, %v1287
        %1289 = vmatprep.mubr.f32.mxu0 %v890
        %1290 = vmatmul.mubr.f32.gmra.mxu0 %v889
        %v1291 = vpop.f32.mrf.mxu0
        %v1292 = vadd.f32 0.0, %v1291
        %v1293 = vpop.f32.mrf.mxu0
        %v1294 = vadd.f32 0.0, %v1293
        %1295 = vmatprep.mubr.f32.mxu0 %v892
        %1296 = vmatmul.mubr.f32.gmra.mxu0 %v891
        %v1297 = vpop.f32.mrf.mxu0
        %v1298 = vadd.f32 0.0, %v1297
        %v1299 = vpop.f32.mrf.mxu0
        %v1300 = vadd.f32 0.0, %v1299
        %1301 = vmatprep.mubr.f32.mxu0 %v894
        %1302 = vmatmul.mubr.f32.gmra.mxu0 %v893
        %v1303 = vpop.f32.mrf.mxu0
        %v1304 = vadd.f32 0.0, %v1303
        %v1305 = vpop.f32.mrf.mxu0
        %v1306 = vadd.f32 0.0, %v1305
        %1307 = vmatprep.mubr.f32.mxu0 %v896
        %1308 = vmatmul.mubr.f32.gmra.mxu0 %v895
        %v1309 = vpop.f32.mrf.mxu0
        %v1310 = vadd.f32 0.0, %v1309
        %v1311 = vpop.f32.mrf.mxu0
        %v1312 = vadd.f32 0.0, %v1311
        %1313 = vdwg.mxu0
        %1314 = vmatprep.subr.mxu0 %v1024
        %1315 = vmatpush1.msra.mxu0 %v1023
        %1316 = vmatprep.subr.mxu0 %v1022
        %1317 = vmatpush1.msra.mxu0 %v1021
        %1318 = vmatprep.subr.mxu0 %v1020
        %1319 = vmatpush1.msra.mxu0 %v1019
        %1320 = vmatprep.subr.mxu0 %v1018
        %1321 = vmatpush1.msra.mxu0 %v1017
        %1322 = vmatprep.subr.mxu0 %v1016
        %1323 = vmatpush1.msra.mxu0 %v1015
        %1324 = vmatprep.subr.mxu0 %v1014
        %1325 = vmatpush1.msra.mxu0 %v1013
        %1326 = vmatprep.subr.mxu0 %v1012
        %1327 = vmatpush1.msra.mxu0 %v1011
        %1328 = vmatprep.subr.mxu0 %v1010
        %1329 = vmatpush1.msra.mxu0 %v1009
        %1330 = vmatprep.subr.mxu0 %v1008
        %1331 = vmatpush1.msra.mxu0 %v1007
        %1332 = vmatprep.subr.mxu0 %v1006
        %1333 = vmatpush1.msra.mxu0 %v1005
        %1334 = vmatprep.subr.mxu0 %v1004
        %1335 = vmatpush1.msra.mxu0 %v1003
        %1336 = vmatprep.subr.mxu0 %v1002
        %1337 = vmatpush1.msra.mxu0 %v1001
        %1338 = vmatprep.subr.mxu0 %v1000
        %1339 = vmatpush1.msra.mxu0 %v999
        %1340 = vmatprep.subr.mxu0 %v998
        %1341 = vmatpush1.msra.mxu0 %v997
        %1342 = vmatprep.subr.mxu0 %v996
        %1343 = vmatpush1.msra.mxu0 %v995
        %1344 = vmatprep.subr.mxu0 %v994
        %1345 = vmatpush1.msra.mxu0 %v993
        %1346 = vmatprep.subr.mxu0 %v1056
        %1347 = vmatpush2.msra.mxu0 %v1055
        %1348 = vmatprep.subr.mxu0 %v1054
        %1349 = vmatpush2.msra.mxu0 %v1053
        %1350 = vmatprep.subr.mxu0 %v1052
        %1351 = vmatpush2.msra.mxu0 %v1051
        %1352 = vmatprep.subr.mxu0 %v1050
        %1353 = vmatpush2.msra.mxu0 %v1049
        %1354 = vmatprep.subr.mxu0 %v1048
        %1355 = vmatpush2.msra.mxu0 %v1047
        %1356 = vmatprep.subr.mxu0 %v1046
        %1357 = vmatpush2.msra.mxu0 %v1045
        %1358 = vmatprep.subr.mxu0 %v1044
        %1359 = vmatpush2.msra.mxu0 %v1043
        %1360 = vmatprep.subr.mxu0 %v1042
        %1361 = vmatpush2.msra.mxu0 %v1041
        %1362 = vmatprep.subr.mxu0 %v1040
        %1363 = vmatpush2.msra.mxu0 %v1039
        %1364 = vmatprep.subr.mxu0 %v1038
        %1365 = vmatpush2.msra.mxu0 %v1037
        %1366 = vmatprep.subr.mxu0 %v1036
        %1367 = vmatpush2.msra.mxu0 %v1035
        %1368 = vmatprep.subr.mxu0 %v1034
        %1369 = vmatpush2.msra.mxu0 %v1033
        %1370 = vmatprep.subr.mxu0 %v1032
        %1371 = vmatpush2.msra.mxu0 %v1031
        %1372 = vmatprep.subr.mxu0 %v1030
        %1373 = vmatpush2.msra.mxu0 %v1029
        %1374 = vmatprep.subr.mxu0 %v1028
        %1375 = vmatpush2.msra.mxu0 %v1027
        %1376 = vmatprep.subr.mxu0 %v1026
        %1377 = vmatpush2.msra.mxu0 %v1025
        %1378 = vmatprep.mubr.f32.mxu0 %v898
        %1379 = vmatmul.mubr.f32.gmra.mxu0 %v897
        %v1380 = vpop.f32.mrf.mxu0
        %v1381 = vadd.f32 0.0, %v1380
        %v1382 = vpop.f32.mrf.mxu0
        %v1383 = vadd.f32 0.0, %v1382
        %1384 = vmatprep.mubr.f32.mxu0 %v900
        %1385 = vmatmul.mubr.f32.gmra.mxu0 %v899
        %v1386 = vpop.f32.mrf.mxu0
        %v1387 = vadd.f32 0.0, %v1386
        %v1388 = vpop.f32.mrf.mxu0
        %v1389 = vadd.f32 0.0, %v1388
        %1390 = vmatprep.mubr.f32.mxu0 %v902
        %1391 = vmatmul.mubr.f32.gmra.mxu0 %v901
        %v1392 = vpop.f32.mrf.mxu0
        %v1393 = vadd.f32 0.0, %v1392
        %v1394 = vpop.f32.mrf.mxu0
        %v1395 = vadd.f32 0.0, %v1394
        %1396 = vmatprep.mubr.f32.mxu0 %v904
        %1397 = vmatmul.mubr.f32.gmra.mxu0 %v903
        %v1398 = vpop.f32.mrf.mxu0
        %v1399 = vadd.f32 0.0, %v1398
        %v1400 = vpop.f32.mrf.mxu0
        %v1401 = vadd.f32 0.0, %v1400
        %1402 = vmatprep.mubr.f32.mxu0 %v906
        %1403 = vmatmul.mubr.f32.gmra.mxu0 %v905
        %v1404 = vpop.f32.mrf.mxu0
        %v1405 = vadd.f32 0.0, %v1404
        %v1406 = vpop.f32.mrf.mxu0
        %v1407 = vadd.f32 0.0, %v1406
        %1408 = vmatprep.mubr.f32.mxu0 %v908
        %1409 = vmatmul.mubr.f32.gmra.mxu0 %v907
        %v1410 = vpop.f32.mrf.mxu0
        %v1411 = vadd.f32 0.0, %v1410
        %v1412 = vpop.f32.mrf.mxu0
        %v1413 = vadd.f32 0.0, %v1412
        %1414 = vmatprep.mubr.f32.mxu0 %v910
        %1415 = vmatmul.mubr.f32.gmra.mxu0 %v909
        %v1416 = vpop.f32.mrf.mxu0
        %v1417 = vadd.f32 0.0, %v1416
        %v1418 = vpop.f32.mrf.mxu0
        %v1419 = vadd.f32 0.0, %v1418
        %1420 = vmatprep.mubr.f32.mxu0 %v912
        %1421 = vmatmul.mubr.f32.gmra.mxu0 %v911
        %v1422 = vpop.f32.mrf.mxu0
        %v1423 = vadd.f32 0.0, %v1422
        %v1424 = vpop.f32.mrf.mxu0
        %v1425 = vadd.f32 0.0, %v1424
        %1426 = vmatprep.mubr.f32.mxu0 %v914
        %1427 = vmatmul.mubr.f32.gmra.mxu0 %v913
        %v1428 = vpop.f32.mrf.mxu0
        %v1429 = vadd.f32 0.0, %v1428
        %v1430 = vpop.f32.mrf.mxu0
        %v1431 = vadd.f32 0.0, %v1430
        %1432 = vmatprep.mubr.f32.mxu0 %v916
        %1433 = vmatmul.mubr.f32.gmra.mxu0 %v915
        %v1434 = vpop.f32.mrf.mxu0
        %v1435 = vadd.f32 0.0, %v1434
        %v1436 = vpop.f32.mrf.mxu0
        %v1437 = vadd.f32 0.0, %v1436
        %1438 = vmatprep.mubr.f32.mxu0 %v918
        %1439 = vmatmul.mubr.f32.gmra.mxu0 %v917
        %v1440 = vpop.f32.mrf.mxu0
        %v1441 = vadd.f32 0.0, %v1440
        %v1442 = vpop.f32.mrf.mxu0
        %v1443 = vadd.f32 0.0, %v1442
        %1444 = vmatprep.mubr.f32.mxu0 %v920
        %1445 = vmatmul.mubr.f32.gmra.mxu0 %v919
        %v1446 = vpop.f32.mrf.mxu0
        %v1447 = vadd.f32 0.0, %v1446
        %v1448 = vpop.f32.mrf.mxu0
        %v1449 = vadd.f32 0.0, %v1448
        %1450 = vmatprep.mubr.f32.mxu0 %v922
        %1451 = vmatmul.mubr.f32.gmra.mxu0 %v921
        %v1452 = vpop.f32.mrf.mxu0
        %v1453 = vadd.f32 0.0, %v1452
        %v1454 = vpop.f32.mrf.mxu0
        %v1455 = vadd.f32 0.0, %v1454
        %1456 = vmatprep.mubr.f32.mxu0 %v924
        %1457 = vmatmul.mubr.f32.gmra.mxu0 %v923
        %v1458 = vpop.f32.mrf.mxu0
        %v1459 = vadd.f32 0.0, %v1458
        %v1460 = vpop.f32.mrf.mxu0
        %v1461 = vadd.f32 0.0, %v1460
        %1462 = vmatprep.mubr.f32.mxu0 %v926
        %1463 = vmatmul.mubr.f32.gmra.mxu0 %v925
        %v1464 = vpop.f32.mrf.mxu0
        %v1465 = vadd.f32 0.0, %v1464
        %v1466 = vpop.f32.mrf.mxu0
        %v1467 = vadd.f32 0.0, %v1466
        %1468 = vmatprep.mubr.f32.mxu0 %v928
        %1469 = vmatmul.mubr.f32.gmra.mxu0 %v927
        %v1470 = vpop.f32.mrf.mxu0
        %v1471 = vadd.f32 0.0, %v1470
        %v1472 = vpop.f32.mrf.mxu0
        %v1473 = vadd.f32 0.0, %v1472
        %1474 = vdwg.mxu0
        %1475 = vmatprep.subr.mxu0 %v1120
        %1476 = vmatpush1.msra.mxu0 %v1119
        %1477 = vmatprep.subr.mxu0 %v1118
        %1478 = vmatpush1.msra.mxu0 %v1117
        %1479 = vmatprep.subr.mxu0 %v1116
        %1480 = vmatpush1.msra.mxu0 %v1115
        %1481 = vmatprep.subr.mxu0 %v1114
        %1482 = vmatpush1.msra.mxu0 %v1113
        %1483 = vmatprep.subr.mxu0 %v1112
        %1484 = vmatpush1.msra.mxu0 %v1111
        %1485 = vmatprep.subr.mxu0 %v1110
        %1486 = vmatpush1.msra.mxu0 %v1109
        %1487 = vmatprep.subr.mxu0 %v1108
        %1488 = vmatpush1.msra.mxu0 %v1107
        %1489 = vmatprep.subr.mxu0 %v1106
        %1490 = vmatpush1.msra.mxu0 %v1105
        %1491 = vmatprep.subr.mxu0 %v1104
        %1492 = vmatpush1.msra.mxu0 %v1103
        %1493 = vmatprep.subr.mxu0 %v1102
        %1494 = vmatpush1.msra.mxu0 %v1101
        %1495 = vmatprep.subr.mxu0 %v1100
        %1496 = vmatpush1.msra.mxu0 %v1099
        %1497 = vmatprep.subr.mxu0 %v1098
        %1498 = vmatpush1.msra.mxu0 %v1097
        %1499 = vmatprep.subr.mxu0 %v1096
        %1500 = vmatpush1.msra.mxu0 %v1095
        %1501 = vmatprep.subr.mxu0 %v1094
        %1502 = vmatpush1.msra.mxu0 %v1093
        %1503 = vmatprep.subr.mxu0 %v1092
        %1504 = vmatpush1.msra.mxu0 %v1091
        %1505 = vmatprep.subr.mxu0 %v1090
        %1506 = vmatpush1.msra.mxu0 %v1089
        %1507 = vmatprep.subr.mxu0 %v1152
        %1508 = vmatpush2.msra.mxu0 %v1151
        %1509 = vmatprep.subr.mxu0 %v1150
        %1510 = vmatpush2.msra.mxu0 %v1149
        %1511 = vmatprep.subr.mxu0 %v1148
        %1512 = vmatpush2.msra.mxu0 %v1147
        %1513 = vmatprep.subr.mxu0 %v1146
        %1514 = vmatpush2.msra.mxu0 %v1145
        %1515 = vmatprep.subr.mxu0 %v1144
        %1516 = vmatpush2.msra.mxu0 %v1143
        %1517 = vmatprep.subr.mxu0 %v1142
        %1518 = vmatpush2.msra.mxu0 %v1141
        %1519 = vmatprep.subr.mxu0 %v1140
        %1520 = vmatpush2.msra.mxu0 %v1139
        %1521 = vmatprep.subr.mxu0 %v1138
        %1522 = vmatpush2.msra.mxu0 %v1137
        %1523 = vmatprep.subr.mxu0 %v1136
        %1524 = vmatpush2.msra.mxu0 %v1135
        %1525 = vmatprep.subr.mxu0 %v1134
        %1526 = vmatpush2.msra.mxu0 %v1133
        %1527 = vmatprep.subr.mxu0 %v1132
        %1528 = vmatpush2.msra.mxu0 %v1131
        %1529 = vmatprep.subr.mxu0 %v1130
        %1530 = vmatpush2.msra.mxu0 %v1129
        %1531 = vmatprep.subr.mxu0 %v1128
        %1532 = vmatpush2.msra.mxu0 %v1127
        %1533 = vmatprep.subr.mxu0 %v1126
        %1534 = vmatpush2.msra.mxu0 %v1125
        %1535 = vmatprep.subr.mxu0 %v1124
        %1536 = vmatpush2.msra.mxu0 %v1123
        %1537 = vmatprep.subr.mxu0 %v1122
        %1538 = vmatpush2.msra.mxu0 %v1121
        %1539 = vmatprep.mubr.f32.mxu0 %v1058
        %1540 = vmatmul.mubr.f32.gmra.mxu0 %v1057
        %v1541 = vpop.f32.mrf.mxu0
        %v1542 = vadd.f32 0.0, %v1541
        %v1543 = vpop.f32.mrf.mxu0
        %v1544 = vadd.f32 0.0, %v1543
        %1545 = vmatprep.mubr.f32.mxu0 %v1060
        %1546 = vmatmul.mubr.f32.gmra.mxu0 %v1059
        %v1547 = vpop.f32.mrf.mxu0
        %v1548 = vadd.f32 0.0, %v1547
        %v1549 = vpop.f32.mrf.mxu0
        %v1550 = vadd.f32 0.0, %v1549
        %1551 = vmatprep.mubr.f32.mxu0 %v1062
        %1552 = vmatmul.mubr.f32.gmra.mxu0 %v1061
        %v1553 = vpop.f32.mrf.mxu0
        %v1554 = vadd.f32 0.0, %v1553
        %v1555 = vpop.f32.mrf.mxu0
        %v1556 = vadd.f32 0.0, %v1555
        %1557 = vmatprep.mubr.f32.mxu0 %v1064
        %1558 = vmatmul.mubr.f32.gmra.mxu0 %v1063
        %v1559 = vpop.f32.mrf.mxu0
        %v1560 = vadd.f32 0.0, %v1559
        %v1561 = vpop.f32.mrf.mxu0
        %v1562 = vadd.f32 0.0, %v1561
        %1563 = vmatprep.mubr.f32.mxu0 %v1066
        %1564 = vmatmul.mubr.f32.gmra.mxu0 %v1065
        %v1565 = vpop.f32.mrf.mxu0
        %v1566 = vadd.f32 0.0, %v1565
        %v1567 = vpop.f32.mrf.mxu0
        %v1568 = vadd.f32 0.0, %v1567
        %1569 = vmatprep.mubr.f32.mxu0 %v1068
        %1570 = vmatmul.mubr.f32.gmra.mxu0 %v1067
        %v1571 = vpop.f32.mrf.mxu0
        %v1572 = vadd.f32 0.0, %v1571
        %v1573 = vpop.f32.mrf.mxu0
        %v1574 = vadd.f32 0.0, %v1573
        %1575 = vmatprep.mubr.f32.mxu0 %v1070
        %1576 = vmatmul.mubr.f32.gmra.mxu0 %v1069
        %v1577 = vpop.f32.mrf.mxu0
        %v1578 = vadd.f32 0.0, %v1577
        %v1579 = vpop.f32.mrf.mxu0
        %v1580 = vadd.f32 0.0, %v1579
        %1581 = vmatprep.mubr.f32.mxu0 %v1072
        %1582 = vmatmul.mubr.f32.gmra.mxu0 %v1071
        %v1583 = vpop.f32.mrf.mxu0
        %v1584 = vadd.f32 0.0, %v1583
        %v1585 = vpop.f32.mrf.mxu0
        %v1586 = vadd.f32 0.0, %v1585
        %1587 = vmatprep.mubr.f32.mxu0 %v1074
        %1588 = vmatmul.mubr.f32.gmra.mxu0 %v1073
        %v1589 = vpop.f32.mrf.mxu0
        %v1590 = vadd.f32 0.0, %v1589
        %v1591 = vpop.f32.mrf.mxu0
        %v1592 = vadd.f32 0.0, %v1591
        %1593 = vmatprep.mubr.f32.mxu0 %v1076
        %1594 = vmatmul.mubr.f32.gmra.mxu0 %v1075
        %v1595 = vpop.f32.mrf.mxu0
        %v1596 = vadd.f32 0.0, %v1595
        %v1597 = vpop.f32.mrf.mxu0
        %v1598 = vadd.f32 0.0, %v1597
        %1599 = vmatprep.mubr.f32.mxu0 %v1078
        %1600 = vmatmul.mubr.f32.gmra.mxu0 %v1077
        %v1601 = vpop.f32.mrf.mxu0
        %v1602 = vadd.f32 0.0, %v1601
        %v1603 = vpop.f32.mrf.mxu0
        %v1604 = vadd.f32 0.0, %v1603
        %1605 = vmatprep.mubr.f32.mxu0 %v1080
        %1606 = vmatmul.mubr.f32.gmra.mxu0 %v1079
        %v1607 = vpop.f32.mrf.mxu0
        %v1608 = vadd.f32 0.0, %v1607
        %v1609 = vpop.f32.mrf.mxu0
        %v1610 = vadd.f32 0.0, %v1609
        %1611 = vmatprep.mubr.f32.mxu0 %v1082
        %1612 = vmatmul.mubr.f32.gmra.mxu0 %v1081
        %v1613 = vpop.f32.mrf.mxu0
        %v1614 = vadd.f32 0.0, %v1613
        %v1615 = vpop.f32.mrf.mxu0
        %v1616 = vadd.f32 0.0, %v1615
        %1617 = vmatprep.mubr.f32.mxu0 %v1084
        %1618 = vmatmul.mubr.f32.gmra.mxu0 %v1083
        %v1619 = vpop.f32.mrf.mxu0
        %v1620 = vadd.f32 0.0, %v1619
        %v1621 = vpop.f32.mrf.mxu0
        %v1622 = vadd.f32 0.0, %v1621
        %1623 = vmatprep.mubr.f32.mxu0 %v1086
        %1624 = vmatmul.mubr.f32.gmra.mxu0 %v1085
        %v1625 = vpop.f32.mrf.mxu0
        %v1626 = vadd.f32 0.0, %v1625
        %v1627 = vpop.f32.mrf.mxu0
        %v1628 = vadd.f32 0.0, %v1627
        %1629 = vmatprep.mubr.f32.mxu0 %v1088
        %1630 = vmatmul.mubr.f32.gmra.mxu0 %v1087
        %v1631 = vpop.f32.mrf.mxu0
        %v1632 = vadd.f32 0.0, %v1631
        %v1633 = vpop.f32.mrf.mxu0
        %v1634 = vadd.f32 0.0, %v1633
        %1635 = vdwg.mxu0
        %v1636 = vld [vmem:[#allocation2] sm:$0xff]
        %v1637 = vld [vmem:[#allocation2 + $0x8] sm:$0xff]
        %v1638 = vld [vmem:[#allocation2 + $0x10] sm:$0xff]
        %v1639 = vld [vmem:[#allocation2 + $0x18] sm:$0xff]
        %v1640 = vld [vmem:[#allocation2 + $0x20] sm:$0xff]
        %v1641 = vld [vmem:[#allocation2 + $0x28] sm:$0xff]
        %v1642 = vld [vmem:[#allocation2 + $0x30] sm:$0xff]
        %v1643 = vld [vmem:[#allocation2 + $0x38] sm:$0xff]
        %v1644 = vld [vmem:[#allocation2 + $0x40] sm:$0xff]
        %v1645 = vld [vmem:[#allocation2 + $0x48] sm:$0xff]
        %v1646 = vld [vmem:[#allocation2 + $0x50] sm:$0xff]
        %v1647 = vld [vmem:[#allocation2 + $0x58] sm:$0xff]
        %v1648 = vld [vmem:[#allocation2 + $0x60] sm:$0xff]
        %v1649 = vld [vmem:[#allocation2 + $0x68] sm:$0xff]
        %v1650 = vld [vmem:[#allocation2 + $0x70] sm:$0xff]
        %v1651 = vld [vmem:[#allocation2 + $0x78] sm:$0xff]
        %v1652 = vld [vmem:[#allocation2 + $0x80] sm:$0xff]
        %v1653 = vld [vmem:[#allocation2 + $0x88] sm:$0xff]
        %v1654 = vld [vmem:[#allocation2 + $0x90] sm:$0xff]
        %v1655 = vld [vmem:[#allocation2 + $0x98] sm:$0xff]
        %v1656 = vld [vmem:[#allocation2 + $0xa0] sm:$0xff]
        %v1657 = vld [vmem:[#allocation2 + $0xa8] sm:$0xff]
        %v1658 = vld [vmem:[#allocation2 + $0xb0] sm:$0xff]
        %v1659 = vld [vmem:[#allocation2 + $0xb8] sm:$0xff]
        %v1660 = vld [vmem:[#allocation2 + $0xc0] sm:$0xff]
        %v1661 = vld [vmem:[#allocation2 + $0xc8] sm:$0xff]
        %v1662 = vld [vmem:[#allocation2 + $0xd0] sm:$0xff]
        %v1663 = vld [vmem:[#allocation2 + $0xd8] sm:$0xff]
        %v1664 = vld [vmem:[#allocation2 + $0xe0] sm:$0xff]
        %v1665 = vld [vmem:[#allocation2 + $0xe8] sm:$0xff]
        %v1666 = vld [vmem:[#allocation2 + $0xf0] sm:$0xff]
        %v1667 = vld [vmem:[#allocation2 + $0xf8] sm:$0xff]
        %v1668 = vsub.f32 %v1220, %v1381
        %v1669 = vsub.f32 %v1222, %v1383
        %v1670 = vsub.f32 %v1226, %v1387
        %v1671 = vsub.f32 %v1228, %v1389
        %v1672 = vsub.f32 %v1232, %v1393
        %v1673 = vsub.f32 %v1234, %v1395
        %v1674 = vsub.f32 %v1238, %v1399
        %v1675 = vsub.f32 %v1240, %v1401
        %v1676 = vsub.f32 %v1244, %v1405
        %v1677 = vsub.f32 %v1246, %v1407
        %v1678 = vsub.f32 %v1250, %v1411
        %v1679 = vsub.f32 %v1252, %v1413
        %v1680 = vsub.f32 %v1256, %v1417
        %v1681 = vsub.f32 %v1258, %v1419
        %v1682 = vsub.f32 %v1262, %v1423
        %v1683 = vsub.f32 %v1264, %v1425
        %v1684 = vsub.f32 %v1268, %v1429
        %v1685 = vsub.f32 %v1270, %v1431
        %v1686 = vsub.f32 %v1274, %v1435
        %v1687 = vsub.f32 %v1276, %v1437
        %v1688 = vsub.f32 %v1280, %v1441
        %v1689 = vsub.f32 %v1282, %v1443
        %v1690 = vsub.f32 %v1286, %v1447
        %v1691 = vsub.f32 %v1288, %v1449
        %v1692 = vsub.f32 %v1292, %v1453
        %v1693 = vsub.f32 %v1294, %v1455
        %v1694 = vsub.f32 %v1298, %v1459
        %v1695 = vsub.f32 %v1300, %v1461
        %v1696 = vsub.f32 %v1304, %v1465
        %v1697 = vsub.f32 %v1306, %v1467
        %v1698 = vsub.f32 %v1310, %v1471
        %v1699 = vsub.f32 %v1312, %v1473
        %v1700 = vadd.f32 %v1636, %v1668
        %v1701 = vadd.f32 %v1637, %v1669
        %v1702 = vadd.f32 %v1638, %v1670
        %v1703 = vadd.f32 %v1639, %v1671
        %v1704 = vadd.f32 %v1640, %v1672
        %v1705 = vadd.f32 %v1641, %v1673
        %v1706 = vadd.f32 %v1642, %v1674
        %v1707 = vadd.f32 %v1643, %v1675
        %v1708 = vadd.f32 %v1644, %v1676
        %v1709 = vadd.f32 %v1645, %v1677
        %v1710 = vadd.f32 %v1646, %v1678
        %v1711 = vadd.f32 %v1647, %v1679
        %v1712 = vadd.f32 %v1648, %v1680
        %v1713 = vadd.f32 %v1649, %v1681
        %v1714 = vadd.f32 %v1650, %v1682
        %v1715 = vadd.f32 %v1651, %v1683
        %v1716 = vadd.f32 %v1652, %v1684
        %v1717 = vadd.f32 %v1653, %v1685
        %v1718 = vadd.f32 %v1654, %v1686
        %v1719 = vadd.f32 %v1655, %v1687
        %v1720 = vadd.f32 %v1656, %v1688
        %v1721 = vadd.f32 %v1657, %v1689
        %v1722 = vadd.f32 %v1658, %v1690
        %v1723 = vadd.f32 %v1659, %v1691
        %v1724 = vadd.f32 %v1660, %v1692
        %v1725 = vadd.f32 %v1661, %v1693
        %v1726 = vadd.f32 %v1662, %v1694
        %v1727 = vadd.f32 %v1663, %v1695
        %v1728 = vadd.f32 %v1664, %v1696
        %v1729 = vadd.f32 %v1665, %v1697
        %v1730 = vadd.f32 %v1666, %v1698
        %v1731 = vadd.f32 %v1667, %v1699
        %1732 = vst [vmem:[#allocation2] sm:$0xff] %v1700
        %1733 = vst [vmem:[#allocation2 + $0x8] sm:$0xff] %v1701
        %1734 = vst [vmem:[#allocation2 + $0x10] sm:$0xff] %v1702
        %1735 = vst [vmem:[#allocation2 + $0x18] sm:$0xff] %v1703
        %1736 = vst [vmem:[#allocation2 + $0x20] sm:$0xff] %v1704
        %1737 = vst [vmem:[#allocation2 + $0x28] sm:$0xff] %v1705
        %1738 = vst [vmem:[#allocation2 + $0x30] sm:$0xff] %v1706
        %1739 = vst [vmem:[#allocation2 + $0x38] sm:$0xff] %v1707
        %1740 = vst [vmem:[#allocation2 + $0x40] sm:$0xff] %v1708
        %1741 = vst [vmem:[#allocation2 + $0x48] sm:$0xff] %v1709
        %1742 = vst [vmem:[#allocation2 + $0x50] sm:$0xff] %v1710
        %1743 = vst [vmem:[#allocation2 + $0x58] sm:$0xff] %v1711
        %1744 = vst [vmem:[#allocation2 + $0x60] sm:$0xff] %v1712
        %1745 = vst [vmem:[#allocation2 + $0x68] sm:$0xff] %v1713
        %1746 = vst [vmem:[#allocation2 + $0x70] sm:$0xff] %v1714
        %1747 = vst [vmem:[#allocation2 + $0x78] sm:$0xff] %v1715
        %1748 = vst [vmem:[#allocation2 + $0x80] sm:$0xff] %v1716
        %1749 = vst [vmem:[#allocation2 + $0x88] sm:$0xff] %v1717
        %1750 = vst [vmem:[#allocation2 + $0x90] sm:$0xff] %v1718
        %1751 = vst [vmem:[#allocation2 + $0x98] sm:$0xff] %v1719
        %1752 = vst [vmem:[#allocation2 + $0xa0] sm:$0xff] %v1720
        %1753 = vst [vmem:[#allocation2 + $0xa8] sm:$0xff] %v1721
        %1754 = vst [vmem:[#allocation2 + $0xb0] sm:$0xff] %v1722
        %1755 = vst [vmem:[#allocation2 + $0xb8] sm:$0xff] %v1723
        %1756 = vst [vmem:[#allocation2 + $0xc0] sm:$0xff] %v1724
        %1757 = vst [vmem:[#allocation2 + $0xc8] sm:$0xff] %v1725
        %1758 = vst [vmem:[#allocation2 + $0xd0] sm:$0xff] %v1726
        %1759 = vst [vmem:[#allocation2 + $0xd8] sm:$0xff] %v1727
        %1760 = vst [vmem:[#allocation2 + $0xe0] sm:$0xff] %v1728
        %1761 = vst [vmem:[#allocation2 + $0xe8] sm:$0xff] %v1729
        %1762 = vst [vmem:[#allocation2 + $0xf0] sm:$0xff] %v1730
        %1763 = vst [vmem:[#allocation2 + $0xf8] sm:$0xff] %v1731
        %v1764 = vld [vmem:[#allocation3] sm:$0xff]
        %v1765 = vld [vmem:[#allocation3 + $0x8] sm:$0xff]
        %v1766 = vld [vmem:[#allocation3 + $0x10] sm:$0xff]
        %v1767 = vld [vmem:[#allocation3 + $0x18] sm:$0xff]
        %v1768 = vld [vmem:[#allocation3 + $0x20] sm:$0xff]
        %v1769 = vld [vmem:[#allocation3 + $0x28] sm:$0xff]
        %v1770 = vld [vmem:[#allocation3 + $0x30] sm:$0xff]
        %v1771 = vld [vmem:[#allocation3 + $0x38] sm:$0xff]
        %v1772 = vld [vmem:[#allocation3 + $0x40] sm:$0xff]
        %v1773 = vld [vmem:[#allocation3 + $0x48] sm:$0xff]
        %v1774 = vld [vmem:[#allocation3 + $0x50] sm:$0xff]
        %v1775 = vld [vmem:[#allocation3 + $0x58] sm:$0xff]
        %v1776 = vld [vmem:[#allocation3 + $0x60] sm:$0xff]
        %v1777 = vld [vmem:[#allocation3 + $0x68] sm:$0xff]
        %v1778 = vld [vmem:[#allocation3 + $0x70] sm:$0xff]
        %v1779 = vld [vmem:[#allocation3 + $0x78] sm:$0xff]
        %v1780 = vld [vmem:[#allocation3 + $0x80] sm:$0xff]
        %v1781 = vld [vmem:[#allocation3 + $0x88] sm:$0xff]
        %v1782 = vld [vmem:[#allocation3 + $0x90] sm:$0xff]
        %v1783 = vld [vmem:[#allocation3 + $0x98] sm:$0xff]
        %v1784 = vld [vmem:[#allocation3 + $0xa0] sm:$0xff]
        %v1785 = vld [vmem:[#allocation3 + $0xa8] sm:$0xff]
        %v1786 = vld [vmem:[#allocation3 + $0xb0] sm:$0xff]
        %v1787 = vld [vmem:[#allocation3 + $0xb8] sm:$0xff]
        %v1788 = vld [vmem:[#allocation3 + $0xc0] sm:$0xff]
        %v1789 = vld [vmem:[#allocation3 + $0xc8] sm:$0xff]
        %v1790 = vld [vmem:[#allocation3 + $0xd0] sm:$0xff]
        %v1791 = vld [vmem:[#allocation3 + $0xd8] sm:$0xff]
        %v1792 = vld [vmem:[#allocation3 + $0xe0] sm:$0xff]
        %v1793 = vld [vmem:[#allocation3 + $0xe8] sm:$0xff]
        %v1794 = vld [vmem:[#allocation3 + $0xf0] sm:$0xff]
        %v1795 = vld [vmem:[#allocation3 + $0xf8] sm:$0xff]
        %v1796 = vsub.f32 %v1542, %v1381
        %v1797 = vsub.f32 %v1544, %v1383
        %v1798 = vsub.f32 %v1548, %v1387
        %v1799 = vsub.f32 %v1550, %v1389
        %v1800 = vsub.f32 %v1554, %v1393
        %v1801 = vsub.f32 %v1556, %v1395
        %v1802 = vsub.f32 %v1560, %v1399
        %v1803 = vsub.f32 %v1562, %v1401
        %v1804 = vsub.f32 %v1566, %v1405
        %v1805 = vsub.f32 %v1568, %v1407
        %v1806 = vsub.f32 %v1572, %v1411
        %v1807 = vsub.f32 %v1574, %v1413
        %v1808 = vsub.f32 %v1578, %v1417
        %v1809 = vsub.f32 %v1580, %v1419
        %v1810 = vsub.f32 %v1584, %v1423
        %v1811 = vsub.f32 %v1586, %v1425
        %v1812 = vsub.f32 %v1590, %v1429
        %v1813 = vsub.f32 %v1592, %v1431
        %v1814 = vsub.f32 %v1596, %v1435
        %v1815 = vsub.f32 %v1598, %v1437
        %v1816 = vsub.f32 %v1602, %v1441
        %v1817 = vsub.f32 %v1604, %v1443
        %v1818 = vsub.f32 %v1608, %v1447
        %v1819 = vsub.f32 %v1610, %v1449
        %v1820 = vsub.f32 %v1614, %v1453
        %v1821 = vsub.f32 %v1616, %v1455
        %v1822 = vsub.f32 %v1620, %v1459
        %v1823 = vsub.f32 %v1622, %v1461
        %v1824 = vsub.f32 %v1626, %v1465
        %v1825 = vsub.f32 %v1628, %v1467
        %v1826 = vsub.f32 %v1632, %v1471
        %v1827 = vsub.f32 %v1634, %v1473
        %v1828 = vsub.f32 %v1796, %v1220
        %v1829 = vsub.f32 %v1797, %v1222
        %v1830 = vsub.f32 %v1798, %v1226
        %v1831 = vsub.f32 %v1799, %v1228
        %v1832 = vsub.f32 %v1800, %v1232
        %v1833 = vsub.f32 %v1801, %v1234
        %v1834 = vsub.f32 %v1802, %v1238
        %v1835 = vsub.f32 %v1803, %v1240
        %v1836 = vsub.f32 %v1804, %v1244
        %v1837 = vsub.f32 %v1805, %v1246
        %v1838 = vsub.f32 %v1806, %v1250
        %v1839 = vsub.f32 %v1807, %v1252
        %v1840 = vsub.f32 %v1808, %v1256
        %v1841 = vsub.f32 %v1809, %v1258
        %v1842 = vsub.f32 %v1810, %v1262
        %v1843 = vsub.f32 %v1811, %v1264
        %v1844 = vsub.f32 %v1812, %v1268
        %v1845 = vsub.f32 %v1813, %v1270
        %v1846 = vsub.f32 %v1814, %v1274
        %v1847 = vsub.f32 %v1815, %v1276
        %v1848 = vsub.f32 %v1816, %v1280
        %v1849 = vsub.f32 %v1817, %v1282
        %v1850 = vsub.f32 %v1818, %v1286
        %v1851 = vsub.f32 %v1819, %v1288
        %v1852 = vsub.f32 %v1820, %v1292
        %v1853 = vsub.f32 %v1821, %v1294
        %v1854 = vsub.f32 %v1822, %v1298
        %v1855 = vsub.f32 %v1823, %v1300
        %v1856 = vsub.f32 %v1824, %v1304
        %v1857 = vsub.f32 %v1825, %v1306
        %v1858 = vsub.f32 %v1826, %v1310
        %v1859 = vsub.f32 %v1827, %v1312
        %v1860 = vadd.f32 %v1764, %v1828
        %v1861 = vadd.f32 %v1765, %v1829
        %v1862 = vadd.f32 %v1766, %v1830
        %v1863 = vadd.f32 %v1767, %v1831
        %v1864 = vadd.f32 %v1768, %v1832
        %v1865 = vadd.f32 %v1769, %v1833
        %v1866 = vadd.f32 %v1770, %v1834
        %v1867 = vadd.f32 %v1771, %v1835
        %v1868 = vadd.f32 %v1772, %v1836
        %v1869 = vadd.f32 %v1773, %v1837
        %v1870 = vadd.f32 %v1774, %v1838
        %v1871 = vadd.f32 %v1775, %v1839
        %v1872 = vadd.f32 %v1776, %v1840
        %v1873 = vadd.f32 %v1777, %v1841
        %v1874 = vadd.f32 %v1778, %v1842
        %v1875 = vadd.f32 %v1779, %v1843
        %v1876 = vadd.f32 %v1780, %v1844
        %v1877 = vadd.f32 %v1781, %v1845
        %v1878 = vadd.f32 %v1782, %v1846
        %v1879 = vadd.f32 %v1783, %v1847
        %v1880 = vadd.f32 %v1784, %v1848
        %v1881 = vadd.f32 %v1785, %v1849
        %v1882 = vadd.f32 %v1786, %v1850
        %v1883 = vadd.f32 %v1787, %v1851
        %v1884 = vadd.f32 %v1788, %v1852
        %v1885 = vadd.f32 %v1789, %v1853
        %v1886 = vadd.f32 %v1790, %v1854
        %v1887 = vadd.f32 %v1791, %v1855
        %v1888 = vadd.f32 %v1792, %v1856
        %v1889 = vadd.f32 %v1793, %v1857
        %v1890 = vadd.f32 %v1794, %v1858
        %v1891 = vadd.f32 %v1795, %v1859
        %1892 = vst [vmem:[#allocation3] sm:$0xff] %v1860
        %1893 = vst [vmem:[#allocation3 + $0x8] sm:$0xff] %v1861
        %1894 = vst [vmem:[#allocation3 + $0x10] sm:$0xff] %v1862
        %1895 = vst [vmem:[#allocation3 + $0x18] sm:$0xff] %v1863
        %1896 = vst [vmem:[#allocation3 + $0x20] sm:$0xff] %v1864
        %1897 = vst [vmem:[#allocation3 + $0x28] sm:$0xff] %v1865
        %1898 = vst [vmem:[#allocation3 + $0x30] sm:$0xff] %v1866
        %1899 = vst [vmem:[#allocation3 + $0x38] sm:$0xff] %v1867
        %1900 = vst [vmem:[#allocation3 + $0x40] sm:$0xff] %v1868
        %1901 = vst [vmem:[#allocation3 + $0x48] sm:$0xff] %v1869
        %1902 = vst [vmem:[#allocation3 + $0x50] sm:$0xff] %v1870
        %1903 = vst [vmem:[#allocation3 + $0x58] sm:$0xff] %v1871
        %1904 = vst [vmem:[#allocation3 + $0x60] sm:$0xff] %v1872
        %1905 = vst [vmem:[#allocation3 + $0x68] sm:$0xff] %v1873
        %1906 = vst [vmem:[#allocation3 + $0x70] sm:$0xff] %v1874
        %1907 = vst [vmem:[#allocation3 + $0x78] sm:$0xff] %v1875
        %1908 = vst [vmem:[#allocation3 + $0x80] sm:$0xff] %v1876
        %1909 = vst [vmem:[#allocation3 + $0x88] sm:$0xff] %v1877
        %1910 = vst [vmem:[#allocation3 + $0x90] sm:$0xff] %v1878
        %1911 = vst [vmem:[#allocation3 + $0x98] sm:$0xff] %v1879
        %1912 = vst [vmem:[#allocation3 + $0xa0] sm:$0xff] %v1880
        %1913 = vst [vmem:[#allocation3 + $0xa8] sm:$0xff] %v1881
        %1914 = vst [vmem:[#allocation3 + $0xb0] sm:$0xff] %v1882
        %1915 = vst [vmem:[#allocation3 + $0xb8] sm:$0xff] %v1883
        %1916 = vst [vmem:[#allocation3 + $0xc0] sm:$0xff] %v1884
        %1917 = vst [vmem:[#allocation3 + $0xc8] sm:$0xff] %v1885
        %1918 = vst [vmem:[#allocation3 + $0xd0] sm:$0xff] %v1886
        %1919 = vst [vmem:[#allocation3 + $0xd8] sm:$0xff] %v1887
        %1920 = vst [vmem:[#allocation3 + $0xe0] sm:$0xff] %v1888
        %1921 = vst [vmem:[#allocation3 + $0xe8] sm:$0xff] %v1889
        %1922 = vst [vmem:[#allocation3 + $0xf0] sm:$0xff] %v1890
        %1923 = vst [vmem:[#allocation3 + $0xf8] sm:$0xff] %v1891
        %p1924 = scmp.eq.s32.totalorder %s24, 1
        // Predicated region
        $region133: #{complex_linear.1} parent=111 // pred_check
          %p1925 = pneg %p1924
        $region134: #{complex_linear.1} parent=111 // pred_check_branch
          %1927 = sbr.rel (%p1925) target = $region136
        $region135: #{complex_linear.1} parent=111 // pred_region
          %v1928 = vld [vmem:[#allocation2] sm:$0xff]
          %v1929 = vld [vmem:[#allocation2 + $0x8] sm:$0xff]
          %v1930 = vld [vmem:[#allocation2 + $0x10] sm:$0xff]
          %v1931 = vld [vmem:[#allocation2 + $0x18] sm:$0xff]
          %v1932 = vld [vmem:[#allocation2 + $0x20] sm:$0xff]
          %v1933 = vld [vmem:[#allocation2 + $0x28] sm:$0xff]
          %v1934 = vld [vmem:[#allocation2 + $0x30] sm:$0xff]
          %v1935 = vld [vmem:[#allocation2 + $0x38] sm:$0xff]
          %v1936 = vld [vmem:[#allocation2 + $0x40] sm:$0xff]
          %v1937 = vld [vmem:[#allocation2 + $0x48] sm:$0xff]
          %v1938 = vld [vmem:[#allocation2 + $0x50] sm:$0xff]
          %v1939 = vld [vmem:[#allocation2 + $0x58] sm:$0xff]
          %v1940 = vld [vmem:[#allocation2 + $0x60] sm:$0xff]
          %v1941 = vld [vmem:[#allocation2 + $0x68] sm:$0xff]
          %v1942 = vld [vmem:[#allocation2 + $0x70] sm:$0xff]
          %v1943 = vld [vmem:[#allocation2 + $0x78] sm:$0xff]
          %v1944 = vld [vmem:[#allocation2 + $0x80] sm:$0xff]
          %v1945 = vld [vmem:[#allocation2 + $0x88] sm:$0xff]
          %v1946 = vld [vmem:[#allocation2 + $0x90] sm:$0xff]
          %v1947 = vld [vmem:[#allocation2 + $0x98] sm:$0xff]
          %v1948 = vld [vmem:[#allocation2 + $0xa0] sm:$0xff]
          %v1949 = vld [vmem:[#allocation2 + $0xa8] sm:$0xff]
          %v1950 = vld [vmem:[#allocation2 + $0xb0] sm:$0xff]
          %v1951 = vld [vmem:[#allocation2 + $0xb8] sm:$0xff]
          %v1952 = vld [vmem:[#allocation2 + $0xc0] sm:$0xff]
          %v1953 = vld [vmem:[#allocation2 + $0xc8] sm:$0xff]
          %v1954 = vld [vmem:[#allocation2 + $0xd0] sm:$0xff]
          %v1955 = vld [vmem:[#allocation2 + $0xd8] sm:$0xff]
          %v1956 = vld [vmem:[#allocation2 + $0xe0] sm:$0xff]
          %v1957 = vld [vmem:[#allocation2 + $0xe8] sm:$0xff]
          %v1958 = vld [vmem:[#allocation2 + $0xf0] sm:$0xff]
          %v1959 = vld [vmem:[#allocation2 + $0xf8] sm:$0xff]
          %1960 = vst [vmem:[%s778] sm:$0xff] %v1928
          %1961 = vst [vmem:[%s778 + $0x8] sm:$0xff] %v1929
          %1962 = vst [vmem:[%s778 + $0x10] sm:$0xff] %v1930
          %1963 = vst [vmem:[%s778 + $0x18] sm:$0xff] %v1931
          %1964 = vst [vmem:[%s778 + $0x20] sm:$0xff] %v1932
          %1965 = vst [vmem:[%s778 + $0x28] sm:$0xff] %v1933
          %1966 = vst [vmem:[%s778 + $0x30] sm:$0xff] %v1934
          %1967 = vst [vmem:[%s778 + $0x38] sm:$0xff] %v1935
          %1968 = vst [vmem:[%s778 + $0x40] sm:$0xff] %v1936
          %1969 = vst [vmem:[%s778 + $0x48] sm:$0xff] %v1937
          %1970 = vst [vmem:[%s778 + $0x50] sm:$0xff] %v1938
          %1971 = vst [vmem:[%s778 + $0x58] sm:$0xff] %v1939
          %1972 = vst [vmem:[%s778 + $0x60] sm:$0xff] %v1940
          %1973 = vst [vmem:[%s778 + $0x68] sm:$0xff] %v1941
          %1974 = vst [vmem:[%s778 + $0x70] sm:$0xff] %v1942
          %1975 = vst [vmem:[%s778 + $0x78] sm:$0xff] %v1943
          %1976 = vst [vmem:[%s778 + $0x80] sm:$0xff] %v1944
          %1977 = vst [vmem:[%s778 + $0x88] sm:$0xff] %v1945
          %1978 = vst [vmem:[%s778 + $0x90] sm:$0xff] %v1946
          %1979 = vst [vmem:[%s778 + $0x98] sm:$0xff] %v1947
          %1980 = vst [vmem:[%s778 + $0xa0] sm:$0xff] %v1948
          %1981 = vst [vmem:[%s778 + $0xa8] sm:$0xff] %v1949
          %1982 = vst [vmem:[%s778 + $0xb0] sm:$0xff] %v1950
          %1983 = vst [vmem:[%s778 + $0xb8] sm:$0xff] %v1951
          %1984 = vst [vmem:[%s778 + $0xc0] sm:$0xff] %v1952
          %1985 = vst [vmem:[%s778 + $0xc8] sm:$0xff] %v1953
          %1986 = vst [vmem:[%s778 + $0xd0] sm:$0xff] %v1954
          %1987 = vst [vmem:[%s778 + $0xd8] sm:$0xff] %v1955
          %1988 = vst [vmem:[%s778 + $0xe0] sm:$0xff] %v1956
          %1989 = vst [vmem:[%s778 + $0xe8] sm:$0xff] %v1957
          %1990 = vst [vmem:[%s778 + $0xf0] sm:$0xff] %v1958
          %1991 = vst [vmem:[%s778 + $0xf8] sm:$0xff] %v1959
          %v1992 = vld [vmem:[#allocation3] sm:$0xff]
          %v1993 = vld [vmem:[#allocation3 + $0x8] sm:$0xff]
          %v1994 = vld [vmem:[#allocation3 + $0x10] sm:$0xff]
          %v1995 = vld [vmem:[#allocation3 + $0x18] sm:$0xff]
          %v1996 = vld [vmem:[#allocation3 + $0x20] sm:$0xff]
          %v1997 = vld [vmem:[#allocation3 + $0x28] sm:$0xff]
          %v1998 = vld [vmem:[#allocation3 + $0x30] sm:$0xff]
          %v1999 = vld [vmem:[#allocation3 + $0x38] sm:$0xff]
          %v2000 = vld [vmem:[#allocation3 + $0x40] sm:$0xff]
          %v2001 = vld [vmem:[#allocation3 + $0x48] sm:$0xff]
          %v2002 = vld [vmem:[#allocation3 + $0x50] sm:$0xff]
          %v2003 = vld [vmem:[#allocation3 + $0x58] sm:$0xff]
          %v2004 = vld [vmem:[#allocation3 + $0x60] sm:$0xff]
          %v2005 = vld [vmem:[#allocation3 + $0x68] sm:$0xff]
          %v2006 = vld [vmem:[#allocation3 + $0x70] sm:$0xff]
          %v2007 = vld [vmem:[#allocation3 + $0x78] sm:$0xff]
          %v2008 = vld [vmem:[#allocation3 + $0x80] sm:$0xff]
          %v2009 = vld [vmem:[#allocation3 + $0x88] sm:$0xff]
          %v2010 = vld [vmem:[#allocation3 + $0x90] sm:$0xff]
          %v2011 = vld [vmem:[#allocation3 + $0x98] sm:$0xff]
          %v2012 = vld [vmem:[#allocation3 + $0xa0] sm:$0xff]
          %v2013 = vld [vmem:[#allocation3 + $0xa8] sm:$0xff]
          %v2014 = vld [vmem:[#allocation3 + $0xb0] sm:$0xff]
          %v2015 = vld [vmem:[#allocation3 + $0xb8] sm:$0xff]
          %v2016 = vld [vmem:[#allocation3 + $0xc0] sm:$0xff]
          %v2017 = vld [vmem:[#allocation3 + $0xc8] sm:$0xff]
          %v2018 = vld [vmem:[#allocation3 + $0xd0] sm:$0xff]
          %v2019 = vld [vmem:[#allocation3 + $0xd8] sm:$0xff]
          %v2020 = vld [vmem:[#allocation3 + $0xe0] sm:$0xff]
          %v2021 = vld [vmem:[#allocation3 + $0xe8] sm:$0xff]
          %v2022 = vld [vmem:[#allocation3 + $0xf0] sm:$0xff]
          %v2023 = vld [vmem:[#allocation3 + $0xf8] sm:$0xff]
          %2024 = vst [vmem:[%s784] sm:$0xff] %v1992
          %2025 = vst [vmem:[%s784 + $0x8] sm:$0xff] %v1993
          %2026 = vst [vmem:[%s784 + $0x10] sm:$0xff] %v1994
          %2027 = vst [vmem:[%s784 + $0x18] sm:$0xff] %v1995
          %2028 = vst [vmem:[%s784 + $0x20] sm:$0xff] %v1996
          %2029 = vst [vmem:[%s784 + $0x28] sm:$0xff] %v1997
          %2030 = vst [vmem:[%s784 + $0x30] sm:$0xff] %v1998
          %2031 = vst [vmem:[%s784 + $0x38] sm:$0xff] %v1999
          %2032 = vst [vmem:[%s784 + $0x40] sm:$0xff] %v2000
          %2033 = vst [vmem:[%s784 + $0x48] sm:$0xff] %v2001
          %2034 = vst [vmem:[%s784 + $0x50] sm:$0xff] %v2002
          %2035 = vst [vmem:[%s784 + $0x58] sm:$0xff] %v2003
          %2036 = vst [vmem:[%s784 + $0x60] sm:$0xff] %v2004
          %2037 = vst [vmem:[%s784 + $0x68] sm:$0xff] %v2005
          %2038 = vst [vmem:[%s784 + $0x70] sm:$0xff] %v2006
          %2039 = vst [vmem:[%s784 + $0x78] sm:$0xff] %v2007
          %2040 = vst [vmem:[%s784 + $0x80] sm:$0xff] %v2008
          %2041 = vst [vmem:[%s784 + $0x88] sm:$0xff] %v2009
          %2042 = vst [vmem:[%s784 + $0x90] sm:$0xff] %v2010
          %2043 = vst [vmem:[%s784 + $0x98] sm:$0xff] %v2011
          %2044 = vst [vmem:[%s784 + $0xa0] sm:$0xff] %v2012
          %2045 = vst [vmem:[%s784 + $0xa8] sm:$0xff] %v2013
          %2046 = vst [vmem:[%s784 + $0xb0] sm:$0xff] %v2014
          %2047 = vst [vmem:[%s784 + $0xb8] sm:$0xff] %v2015
          %2048 = vst [vmem:[%s784 + $0xc0] sm:$0xff] %v2016
          %2049 = vst [vmem:[%s784 + $0xc8] sm:$0xff] %v2017
          %2050 = vst [vmem:[%s784 + $0xd0] sm:$0xff] %v2018
          %2051 = vst [vmem:[%s784 + $0xd8] sm:$0xff] %v2019
          %2052 = vst [vmem:[%s784 + $0xe0] sm:$0xff] %v2020
          %2053 = vst [vmem:[%s784 + $0xe8] sm:$0xff] %v2021
          %2054 = vst [vmem:[%s784 + $0xf0] sm:$0xff] %v2022
          %2055 = vst [vmem:[%s784 + $0xf8] sm:$0xff] %v2023
        $region136: #{complex_linear.1} parent=111 // pred_fallthru
          _
        %s2056 = sand.u32 %s158, 1
        %s2057 = sand.u32 %s158, 1
        %s2058 = smul.addr %s2057, 256
        %s2059 = scalar_lea.vmem [#allocation8], %s2058
        %s2060 = sand.u32 %s186, 1
        %s2061 = sand.u32 %s186, 1
        %s2062 = smul.addr %s2061, 256
        %s2063 = scalar_lea.vmem [#allocation9], %s2062
        // Predicated region
        $region137: #{complex_linear.1} parent=111 // pred_check
          %p2064 = pneg %p168
        $region138: #{complex_linear.1} parent=111 // pred_check_branch
          %2066 = sbr.rel (%p2064) target = $region140
        $region139: #{complex_linear.1} parent=111 // pred_region
          %s2067 = smul.u32 16, %s22
          %s2068 = smul.u32 2, %s23
          %s2069 = smul.addr %s2067, 4
          %s2070 = sadd.s32 %s2068, %s2069
          %s2071 = smul.addr %s2070, 8
          %s2072 = scalar_lea.vmem %s4, %s2071
          // Predicated region
          $region141: #{complex_linear.1} parent=139 // pred_check
            _
          $region142: #{complex_linear.1} parent=139 // pred_check_branch
            %2074 = sbr.rel (0) target = $region144
          $region143: #{complex_linear.1} parent=139 // pred_region
            // Predicated region
            $region145: #{complex_linear.1} parent=143 // pred_check
              _
            $region146: #{complex_linear.1} parent=143 // pred_check_branch
              %2076 = sbr.rel (0) target = $region148
            $region147: #{complex_linear.1} parent=143 // pred_region
              loop: start=0, step=1, limit=1
              $region149: #{complex_linear.1} parent=147 // loop_pre_header
                _
              $region150: #{complex_linear.1} parent=147 // loop_header
                %s2078 = sphi 0, %s2082
                %p2079 = scmp.ge.s32.totalorder %s2078, 1
                %s2083 = sphi %s2059, %s2059
                %s2084 = sphi %s2072, %s2072
              $region151: #{complex_linear.1} parent=147 // loop_header_branch
                %2081 = sbr.rel (%p2079) target = $region155
              $region152: #{complex_linear.1} parent=147 // loop_body
                %v2085 = vld [vmem:[%s2083] sm:$0xff]
                %2086 = vst [vmem:[%s2084] sm:$0xff] %v2085
                %v2087 = vld [vmem:[%s2083 + $0x8] sm:$0xff]
                %2088 = vst [vmem:[%s2084 + $0x8] sm:$0xff] %v2087
                %v2089 = vld [vmem:[%s2083 + $0x10] sm:$0xff]
                %2090 = vst [vmem:[%s2084 + $0x20] sm:$0xff] %v2089
                %v2091 = vld [vmem:[%s2083 + $0x18] sm:$0xff]
                %2092 = vst [vmem:[%s2084 + $0x28] sm:$0xff] %v2091
                %v2093 = vld [vmem:[%s2083 + $0x20] sm:$0xff]
                %2094 = vst [vmem:[%s2084 + $0x40] sm:$0xff] %v2093
                %v2095 = vld [vmem:[%s2083 + $0x28] sm:$0xff]
                %2096 = vst [vmem:[%s2084 + $0x48] sm:$0xff] %v2095
                %v2097 = vld [vmem:[%s2083 + $0x30] sm:$0xff]
                %2098 = vst [vmem:[%s2084 + $0x60] sm:$0xff] %v2097
                %v2099 = vld [vmem:[%s2083 + $0x38] sm:$0xff]
                %2100 = vst [vmem:[%s2084 + $0x68] sm:$0xff] %v2099
                %v2101 = vld [vmem:[%s2083 + $0x40] sm:$0xff]
                %2102 = vst [vmem:[%s2084 + $0x80] sm:$0xff] %v2101
                %v2103 = vld [vmem:[%s2083 + $0x48] sm:$0xff]
                %2104 = vst [vmem:[%s2084 + $0x88] sm:$0xff] %v2103
                %v2105 = vld [vmem:[%s2083 + $0x50] sm:$0xff]
                %2106 = vst [vmem:[%s2084 + $0xa0] sm:$0xff] %v2105
                %v2107 = vld [vmem:[%s2083 + $0x58] sm:$0xff]
                %2108 = vst [vmem:[%s2084 + $0xa8] sm:$0xff] %v2107
                %v2109 = vld [vmem:[%s2083 + $0x60] sm:$0xff]
                %2110 = vst [vmem:[%s2084 + $0xc0] sm:$0xff] %v2109
                %v2111 = vld [vmem:[%s2083 + $0x68] sm:$0xff]
                %2112 = vst [vmem:[%s2084 + $0xc8] sm:$0xff] %v2111
                %v2113 = vld [vmem:[%s2083 + $0x70] sm:$0xff]
                %2114 = vst [vmem:[%s2084 + $0xe0] sm:$0xff] %v2113
                %v2115 = vld [vmem:[%s2083 + $0x78] sm:$0xff]
                %2116 = vst [vmem:[%s2084 + $0xe8] sm:$0xff] %v2115
                %v2117 = vld [vmem:[%s2083 + $0x80] sm:$0xff]
                %2118 = vst [vmem:[%s2084 + $0x100] sm:$0xff] %v2117
                %v2119 = vld [vmem:[%s2083 + $0x88] sm:$0xff]
                %2120 = vst [vmem:[%s2084 + $0x108] sm:$0xff] %v2119
                %v2121 = vld [vmem:[%s2083 + $0x90] sm:$0xff]
                %2122 = vst [vmem:[%s2084 + $0x120] sm:$0xff] %v2121
                %v2123 = vld [vmem:[%s2083 + $0x98] sm:$0xff]
                %2124 = vst [vmem:[%s2084 + $0x128] sm:$0xff] %v2123
                %v2125 = vld [vmem:[%s2083 + $0xa0] sm:$0xff]
                %2126 = vst [vmem:[%s2084 + $0x140] sm:$0xff] %v2125
                %v2127 = vld [vmem:[%s2083 + $0xa8] sm:$0xff]
                %2128 = vst [vmem:[%s2084 + $0x148] sm:$0xff] %v2127
                %v2129 = vld [vmem:[%s2083 + $0xb0] sm:$0xff]
                %2130 = vst [vmem:[%s2084 + $0x160] sm:$0xff] %v2129
                %v2131 = vld [vmem:[%s2083 + $0xb8] sm:$0xff]
                %2132 = vst [vmem:[%s2084 + $0x168] sm:$0xff] %v2131
                %v2133 = vld [vmem:[%s2083 + $0xc0] sm:$0xff]
                %2134 = vst [vmem:[%s2084 + $0x180] sm:$0xff] %v2133
                %v2135 = vld [vmem:[%s2083 + $0xc8] sm:$0xff]
                %2136 = vst [vmem:[%s2084 + $0x188] sm:$0xff] %v2135
                %v2137 = vld [vmem:[%s2083 + $0xd0] sm:$0xff]
                %2138 = vst [vmem:[%s2084 + $0x1a0] sm:$0xff] %v2137
                %v2139 = vld [vmem:[%s2083 + $0xd8] sm:$0xff]
                %2140 = vst [vmem:[%s2084 + $0x1a8] sm:$0xff] %v2139
                %v2141 = vld [vmem:[%s2083 + $0xe0] sm:$0xff]
                %2142 = vst [vmem:[%s2084 + $0x1c0] sm:$0xff] %v2141
                %v2143 = vld [vmem:[%s2083 + $0xe8] sm:$0xff]
                %2144 = vst [vmem:[%s2084 + $0x1c8] sm:$0xff] %v2143
                %v2145 = vld [vmem:[%s2083 + $0xf0] sm:$0xff]
                %2146 = vst [vmem:[%s2084 + $0x1e0] sm:$0xff] %v2145
                %v2147 = vld [vmem:[%s2083 + $0xf8] sm:$0xff]
                %2148 = vst [vmem:[%s2084 + $0x1e8] sm:$0xff] %v2147
              $region153: #{complex_linear.1} parent=147 // loop_footer
                %s2082 = sadd.s32 1, %s2078
              $region154: #{complex_linear.1} parent=147 // loop_footer_branch
                %2077 = sbr.rel target = $region150
              $region155: #{complex_linear.1} parent=147 // loop_exit
                _
            $region148: #{complex_linear.1} parent=143 // pred_fallthru
              _
            // Predicated region
            $region156: #{complex_linear.1} parent=143 // pred_check
              _
            $region157: #{complex_linear.1} parent=143 // pred_check_branch
              %2150 = sbr.rel target = $region159
            $region158: #{complex_linear.1} parent=143 // pred_region
              _
            $region159: #{complex_linear.1} parent=143 // pred_fallthru
              _
          $region144: #{complex_linear.1} parent=139 // pred_fallthru
            _
          %2151 = vnop
        $region140: #{complex_linear.1} parent=111 // pred_fallthru
          _
        // Predicated region
        $region160: #{complex_linear.1} parent=111 // pred_check
          %p2152 = pneg %p196
        $region161: #{complex_linear.1} parent=111 // pred_check_branch
          %2154 = sbr.rel (%p2152) target = $region163
        $region162: #{complex_linear.1} parent=111 // pred_region
          %s2155 = smul.u32 16, %s22
          %s2156 = smul.u32 2, %s23
          %s2157 = smul.addr %s2155, 4
          %s2158 = sadd.s32 %s2156, %s2157
          %s2159 = smul.addr %s2158, 8
          %s2160 = scalar_lea.vmem %s5, %s2159
          // Predicated region
          $region164: #{complex_linear.1} parent=162 // pred_check
            _
          $region165: #{complex_linear.1} parent=162 // pred_check_branch
            %2162 = sbr.rel (0) target = $region167
          $region166: #{complex_linear.1} parent=162 // pred_region
            // Predicated region
            $region168: #{complex_linear.1} parent=166 // pred_check
              _
            $region169: #{complex_linear.1} parent=166 // pred_check_branch
              %2164 = sbr.rel (0) target = $region171
            $region170: #{complex_linear.1} parent=166 // pred_region
              loop: start=0, step=1, limit=1
              $region172: #{complex_linear.1} parent=170 // loop_pre_header
                _
              $region173: #{complex_linear.1} parent=170 // loop_header
                %s2166 = sphi 0, %s2170
                %p2167 = scmp.ge.s32.totalorder %s2166, 1
                %s2171 = sphi %s2063, %s2063
                %s2172 = sphi %s2160, %s2160
              $region174: #{complex_linear.1} parent=170 // loop_header_branch
                %2169 = sbr.rel (%p2167) target = $region178
              $region175: #{complex_linear.1} parent=170 // loop_body
                %v2173 = vld [vmem:[%s2171] sm:$0xff]
                %2174 = vst [vmem:[%s2172] sm:$0xff] %v2173
                %v2175 = vld [vmem:[%s2171 + $0x8] sm:$0xff]
                %2176 = vst [vmem:[%s2172 + $0x8] sm:$0xff] %v2175
                %v2177 = vld [vmem:[%s2171 + $0x10] sm:$0xff]
                %2178 = vst [vmem:[%s2172 + $0x20] sm:$0xff] %v2177
                %v2179 = vld [vmem:[%s2171 + $0x18] sm:$0xff]
                %2180 = vst [vmem:[%s2172 + $0x28] sm:$0xff] %v2179
                %v2181 = vld [vmem:[%s2171 + $0x20] sm:$0xff]
                %2182 = vst [vmem:[%s2172 + $0x40] sm:$0xff] %v2181
                %v2183 = vld [vmem:[%s2171 + $0x28] sm:$0xff]
                %2184 = vst [vmem:[%s2172 + $0x48] sm:$0xff] %v2183
                %v2185 = vld [vmem:[%s2171 + $0x30] sm:$0xff]
                %2186 = vst [vmem:[%s2172 + $0x60] sm:$0xff] %v2185
                %v2187 = vld [vmem:[%s2171 + $0x38] sm:$0xff]
                %2188 = vst [vmem:[%s2172 + $0x68] sm:$0xff] %v2187
                %v2189 = vld [vmem:[%s2171 + $0x40] sm:$0xff]
                %2190 = vst [vmem:[%s2172 + $0x80] sm:$0xff] %v2189
                %v2191 = vld [vmem:[%s2171 + $0x48] sm:$0xff]
                %2192 = vst [vmem:[%s2172 + $0x88] sm:$0xff] %v2191
                %v2193 = vld [vmem:[%s2171 + $0x50] sm:$0xff]
                %2194 = vst [vmem:[%s2172 + $0xa0] sm:$0xff] %v2193
                %v2195 = vld [vmem:[%s2171 + $0x58] sm:$0xff]
                %2196 = vst [vmem:[%s2172 + $0xa8] sm:$0xff] %v2195
                %v2197 = vld [vmem:[%s2171 + $0x60] sm:$0xff]
                %2198 = vst [vmem:[%s2172 + $0xc0] sm:$0xff] %v2197
                %v2199 = vld [vmem:[%s2171 + $0x68] sm:$0xff]
                %2200 = vst [vmem:[%s2172 + $0xc8] sm:$0xff] %v2199
                %v2201 = vld [vmem:[%s2171 + $0x70] sm:$0xff]
                %2202 = vst [vmem:[%s2172 + $0xe0] sm:$0xff] %v2201
                %v2203 = vld [vmem:[%s2171 + $0x78] sm:$0xff]
                %2204 = vst [vmem:[%s2172 + $0xe8] sm:$0xff] %v2203
                %v2205 = vld [vmem:[%s2171 + $0x80] sm:$0xff]
                %2206 = vst [vmem:[%s2172 + $0x100] sm:$0xff] %v2205
                %v2207 = vld [vmem:[%s2171 + $0x88] sm:$0xff]
                %2208 = vst [vmem:[%s2172 + $0x108] sm:$0xff] %v2207
                %v2209 = vld [vmem:[%s2171 + $0x90] sm:$0xff]
                %2210 = vst [vmem:[%s2172 + $0x120] sm:$0xff] %v2209
                %v2211 = vld [vmem:[%s2171 + $0x98] sm:$0xff]
                %2212 = vst [vmem:[%s2172 + $0x128] sm:$0xff] %v2211
                %v2213 = vld [vmem:[%s2171 + $0xa0] sm:$0xff]
                %2214 = vst [vmem:[%s2172 + $0x140] sm:$0xff] %v2213
                %v2215 = vld [vmem:[%s2171 + $0xa8] sm:$0xff]
                %2216 = vst [vmem:[%s2172 + $0x148] sm:$0xff] %v2215
                %v2217 = vld [vmem:[%s2171 + $0xb0] sm:$0xff]
                %2218 = vst [vmem:[%s2172 + $0x160] sm:$0xff] %v2217
                %v2219 = vld [vmem:[%s2171 + $0xb8] sm:$0xff]
                %2220 = vst [vmem:[%s2172 + $0x168] sm:$0xff] %v2219
                %v2221 = vld [vmem:[%s2171 + $0xc0] sm:$0xff]
                %2222 = vst [vmem:[%s2172 + $0x180] sm:$0xff] %v2221
                %v2223 = vld [vmem:[%s2171 + $0xc8] sm:$0xff]
                %2224 = vst [vmem:[%s2172 + $0x188] sm:$0xff] %v2223
                %v2225 = vld [vmem:[%s2171 + $0xd0] sm:$0xff]
                %2226 = vst [vmem:[%s2172 + $0x1a0] sm:$0xff] %v2225
                %v2227 = vld [vmem:[%s2171 + $0xd8] sm:$0xff]
                %2228 = vst [vmem:[%s2172 + $0x1a8] sm:$0xff] %v2227
                %v2229 = vld [vmem:[%s2171 + $0xe0] sm:$0xff]
                %2230 = vst [vmem:[%s2172 + $0x1c0] sm:$0xff] %v2229
                %v2231 = vld [vmem:[%s2171 + $0xe8] sm:$0xff]
                %2232 = vst [vmem:[%s2172 + $0x1c8] sm:$0xff] %v2231
                %v2233 = vld [vmem:[%s2171 + $0xf0] sm:$0xff]
                %2234 = vst [vmem:[%s2172 + $0x1e0] sm:$0xff] %v2233
                %v2235 = vld [vmem:[%s2171 + $0xf8] sm:$0xff]
                %2236 = vst [vmem:[%s2172 + $0x1e8] sm:$0xff] %v2235
              $region176: #{complex_linear.1} parent=170 // loop_footer
                %s2170 = sadd.s32 1, %s2166
              $region177: #{complex_linear.1} parent=170 // loop_footer_branch
                %2165 = sbr.rel target = $region173
              $region178: #{complex_linear.1} parent=170 // loop_exit
                _
            $region171: #{complex_linear.1} parent=166 // pred_fallthru
              _
            // Predicated region
            $region179: #{complex_linear.1} parent=166 // pred_check
              _
            $region180: #{complex_linear.1} parent=166 // pred_check_branch
              %2238 = sbr.rel target = $region182
            $region181: #{complex_linear.1} parent=166 // pred_region
              _
            $region182: #{complex_linear.1} parent=166 // pred_fallthru
              _
          $region167: #{complex_linear.1} parent=162 // pred_fallthru
            _
          %2239 = vnop
        $region163: #{complex_linear.1} parent=111 // pred_fallthru
          _
      $region112: #{complex_linear.1} parent=5 // pred_fallthru
        _
      %p2240 = scmp.le.s32.totalorder 2, %s12
      // Predicated region
      $region183: #{complex_linear.1} parent=5 // pred_check
        %p2241 = pneg %p2240
      $region184: #{complex_linear.1} parent=5 // pred_check_branch
        %2243 = sbr.rel (%p2241) target = $region186
      $region185: #{complex_linear.1} parent=5 // pred_region
        %s2244 = ssub.s32 %s12, 2
        // Predicated region
        $region187: #{complex_linear.1} parent=185 // pred_check
          %p2245 = pneg %p174
        $region188: #{complex_linear.1} parent=185 // pred_check_branch
          %2247 = sbr.rel (%p2245) target = $region190
        $region189: #{complex_linear.1} parent=185 // pred_region
          %s2248 = sand.u32 %s159, 1
          %s2249 = sand.u32 %s159, 1
          %s2250 = smul.addr %s2249, 256
          %s2251 = scalar_lea.vmem [#allocation8], %s2250
        $region190: #{complex_linear.1} parent=185 // pred_fallthru
          _
        // Predicated region
        $region191: #{complex_linear.1} parent=185 // pred_check
          %p2252 = pneg %p202
        $region192: #{complex_linear.1} parent=185 // pred_check_branch
          %2254 = sbr.rel (%p2252) target = $region194
        $region193: #{complex_linear.1} parent=185 // pred_region
          %s2255 = sand.u32 %s187, 1
          %s2256 = sand.u32 %s187, 1
          %s2257 = smul.addr %s2256, 256
          %s2258 = scalar_lea.vmem [#allocation9], %s2257
        $region194: #{complex_linear.1} parent=185 // pred_fallthru
          _
      $region186: #{complex_linear.1} parent=5 // pred_fallthru
        _
    $region6: #{complex_linear.1} parent=1 // loop_footer
      %s16 = sadd.s32 1, %s12
    $region7: #{complex_linear.1} parent=1 // loop_footer_branch
      %11 = sbr.rel target = $region3
    $region8: #{complex_linear.1} parent=1 // loop_exit
      _

</llo_original>
